<compile_context>
chip_gen: v6e
topology: v6e:2x2x1
jax: 0.10.0
libtpu: 0.0.40
codegen_flags: <defaults>
</compile_context>

<pallas_src>
import jax
import jax.numpy as jnp
from jax.experimental import pallas as pl
from jax.experimental.pallas import tpu as pltpu


def _seq_attention_kernel(x_ref, w1_ref, b1_ref, w2_ref, b2_ref, o_ref):
    # x_ref:  (G, C_in, L) f32   (G batches per grid step, native NCL layout)
    # w1_ref: (H, C_in)    bf16  (BN1 scale folded in)
    # b1_ref: (H, 1)       f32   (folded BN1 bias)
    # w2_ref: (K, H)       bf16  (BN2 scale folded in)
    # b2_ref: (K, 1)       f32   (folded BN2 bias)
    # o_ref:  (G, K, L)    f32
    g_per_step = x_ref.shape[0]
    w1 = w1_ref[...]
    w2 = w2_ref[...]
    b1 = b1_ref[...]
    b2 = b2_ref[...]

    # Static unroll over the batches handled by this grid step.
    for g in range(g_per_step):
        x = x_ref[g].astype(jnp.bfloat16)                        # (C_in, L)

        # conv1 (kernel_size=1, no bias) + folded bn1 + ReLU; bf16 MXU, f32 acc.
        h = jnp.dot(w1, x, preferred_element_type=jnp.float32)   # (H, L) f32
        h = jnp.maximum(h + b1, 0.0).astype(jnp.bfloat16)

        # conv2 (kernel_size=1, no bias) + folded bn2; single-pass bf16 MXU.
        s = jnp.dot(w2, h, preferred_element_type=jnp.float32) + b2   # (K, L) f32

        # softmax over the sequence axis (lane axis of (K, L)); exact divide.
        m = jnp.max(s, axis=-1, keepdims=True)
        e = jnp.exp(s - m)
        p = e / jnp.sum(e, axis=-1, keepdims=True)                # (K, L)

        o_ref[g] = p.astype(o_ref.dtype)


def _single_tensorcore_device() -> bool:
    """True for single-TensorCore parts (v5e/v6e); False for v7x/v5p/v4-style
    multi-TC chips where per-batch 'parallel' grid steps use both cores."""
    try:
        kind = jax.devices()[0].device_kind.lower()
    except Exception:
        return True
    multi_tc = ("v7" in kind) or ("7x" in kind) or ("v5p" in kind) or ("v4" in kind)
    return not multi_tc


def seq_attention_forward(x_ncl, w1, w2, bn1_params, bn2_params, *,
                          eps=1e-5, batch_group=None):
    """x_ncl: (B, C_in, L) float32 (PyTorch NCL layout, consumed as-is).
    w1: (H, C_in, 1), w2: (K, H, 1)  -- PyTorch Conv1d weight layouts.
    bn*_params: (gamma, beta, running_mean, running_var).
    Returns (B, K, L) float32."""
    B, C_in, L = x_ncl.shape
    H = w1.shape[0]
    K = w2.shape[0]

    # Fold batch-norms (eval mode) into per-channel scale / bias.
    def fold(params):
        g, b, rm, rv = params
        scale = (g / jnp.sqrt(rv + eps)).astype(jnp.float32)
        bias = (b - rm * scale).astype(jnp.float32)
        return scale, bias

    scale1, bias1 = fold(bn1_params)     # (H,)
    scale2, bias2 = fold(bn2_params)     # (K,)

    # Fold BN scales into the conv weights (one-off on constant parameters),
    # and ship both weights as bf16 so each dot is a single bf16 MXU pass.
    w1_f = (w1[:, :, 0].astype(jnp.float32) * scale1[:, None]).astype(jnp.bfloat16)  # (H, C_in)
    w2_f = (w2[:, :, 0].astype(jnp.float32) * scale2[:, None]).astype(jnp.bfloat16)  # (K, H)
    b1 = bias1.reshape(H, 1)
    b2 = bias2.reshape(K, 1)

    # Batch grouping per grid step: merge all batches on single-TC parts,
    # keep one batch per step (parallel across TensorCores) otherwise.
    if batch_group is None:
        batch_group = B if _single_tensorcore_device() else 1
    G = batch_group if (batch_group >= 1 and B % batch_group == 0) else 1
    num_steps = B // G

    # Advisory cost so XLA schedules/overlaps this tiny call sensibly.
    cost = pl.CostEstimate(
        flops=2 * B * L * H * (C_in + K),
        transcendentals=B * K * L,
        bytes_accessed=(B * C_in * L * 4          # x (f32, read once)
                        + H * C_in * 2 + K * H * 2  # bf16 weights
                        + H * 4 + K * 4             # biases
                        + B * K * L * 4),           # output
    )

    out = pl.pallas_call(
        _seq_attention_kernel,
        out_shape=jax.ShapeDtypeStruct((B, K, L), jnp.float32),
        grid_spec=pltpu.PrefetchScalarGridSpec(
            num_scalar_prefetch=0,
            grid=(num_steps,),
            in_specs=[
                pl.BlockSpec((G, C_in, L), lambda i: (i, 0, 0)),
                pl.BlockSpec((H, C_in), lambda i: (0, 0)),
                pl.BlockSpec((H, 1), lambda i: (0, 0)),
                pl.BlockSpec((K, H), lambda i: (0, 0)),
                pl.BlockSpec((K, 1), lambda i: (0, 0)),
            ],
            out_specs=pl.BlockSpec((G, K, L), lambda i: (i, 0, 0)),
        ),
        compiler_params=pltpu.CompilerParams(
            dimension_semantics=("parallel",),
        ),
        cost_estimate=cost,
    )(x_ncl.astype(jnp.float32), w1_f, b1, w2_f, b2)
    return out


def _reference_forward(x_ncl, w1, w2, bn1_params, bn2_params, *, eps=1e-5):
    """Pure-JAX f32 reference (same eval-mode BN semantics)."""
    def fold(params):
        g, b, rm, rv = params
        scale = g / jnp.sqrt(rv + eps)
        bias = b - rm * scale
        return scale, bias

    s1, b1 = fold(bn1_params)
    s2, b2 = fold(bn2_params)
    w1m = w1[:, :, 0]                      # (H, C_in)
    w2m = w2[:, :, 0]                      # (K, H)
    h = jnp.einsum("hc,bcl->bhl", w1m, x_ncl)
    h = jnp.maximum(h * s1[None, :, None] + b1[None, :, None], 0.0)
    s = jnp.einsum("kh,bhl->bkl", w2m, h)
    s = s * s2[None, :, None] + b2[None, :, None]
    return jax.nn.softmax(s, axis=-1)


if __name__ == "__main__":
    # Module hyper-parameters (Conv1d in_channels=2048 is hard-coded in the module).
    B = 2
    C_IN = 2048
    HID = 64
    K = 3
    SEQLEN = 64

    key = jax.random.PRNGKey(0)
    kx, kw1, kw2 = jax.random.split(key, 3)

    # Deterministic synthetic parameters (Conv1d default-ish uniform scale).
    x = jax.random.normal(kx, (B, C_IN, SEQLEN), dtype=jnp.float32)
    bound1 = 1.0 / jnp.sqrt(C_IN)
    bound2 = 1.0 / jnp.sqrt(HID)
    w1 = jax.random.uniform(kw1, (HID, C_IN, 1), minval=-bound1, maxval=bound1,
                            dtype=jnp.float32)
    w2 = jax.random.uniform(kw2, (K, HID, 1), minval=-bound2, maxval=bound2,
                            dtype=jnp.float32)

    # BatchNorm params per reset_params: gamma=1, beta=0; running stats at defaults.
    bn1 = (jnp.ones((HID,), jnp.float32), jnp.zeros((HID,), jnp.float32),
           jnp.zeros((HID,), jnp.float32), jnp.ones((HID,), jnp.float32))
    bn2 = (jnp.ones((K,), jnp.float32), jnp.zeros((K,), jnp.float32),
           jnp.zeros((K,), jnp.float32), jnp.ones((K,), jnp.float32))

    atn = seq_attention_forward(x, w1, w2, bn1, bn2)
    atn = jax.block_until_ready(atn)

    # Sanity checks: shape, finiteness, softmax normalization over the seq axis,
    # and agreement with the pure-JAX f32 reference (loose: bf16 MXU inputs).
    assert atn.shape == (B, K, SEQLEN), atn.shape
    assert bool(jnp.all(jnp.isfinite(atn)))
    sums = jnp.sum(atn, axis=-1)
    assert bool(jnp.allclose(sums, jnp.ones_like(sums), atol=1e-4)), sums

    ref = _reference_forward(x, w1, w2, bn1, bn2)
    assert bool(jnp.allclose(atn, ref, atol=3e-3, rtol=3e-2)), \
        float(jnp.max(jnp.abs(atn - ref)))

    print("KERNEL_OK")
</pallas_src>

<mosaic_0001>
module attributes {stable_mosaic.version = 11 : i64} {
  func.func @_seq_attention_kernel(%arg0: i32, %arg1: memref<2x2048x64xf32, #tpu.memory_space<vmem>>, %arg2: memref<64x2048xbf16, #tpu.memory_space<vmem>>, %arg3: memref<64x1xf32, #tpu.memory_space<vmem>>, %arg4: memref<3x64xbf16, #tpu.memory_space<vmem>>, %arg5: memref<3x1xf32, #tpu.memory_space<vmem>>, %arg6: memref<2x3x64xf32, #tpu.memory_space<vmem>>) attributes {dimension_semantics = [#tpu.dimension_semantics<parallel>], iteration_bounds = array<i64: 1>, scalar_prefetch = 0 : i64, scratch_operands = 0 : i64, tpu.core_type = #tpu.core_type<tc>, window_params = [{transform_indices = @transform_0, window_bounds = array<i64: 2, 2048, 64>}, {pipeline_mode = #tpu.pipeline_mode<synchronous>, transform_indices = @transform_1, window_bounds = array<i64: 64, 2048>}, {pipeline_mode = #tpu.pipeline_mode<synchronous>, transform_indices = @transform_2, window_bounds = array<i64: 64, 1>}, {pipeline_mode = #tpu.pipeline_mode<synchronous>, transform_indices = @transform_3, window_bounds = array<i64: 3, 64>}, {pipeline_mode = #tpu.pipeline_mode<synchronous>, transform_indices = @transform_4, window_bounds = array<i64: 3, 1>}, {transform_indices = @transform_5, window_bounds = array<i64: 2, 3, 64>}]} {
    %c0 = arith.constant 0 : index
    %c0_0 = arith.constant 0 : index
    %0 = vector.load %arg2[%c0, %c0_0] : memref<64x2048xbf16, #tpu.memory_space<vmem>>, vector<64x2048xbf16>
    %c0_1 = arith.constant 0 : index
    %c0_2 = arith.constant 0 : index
    %1 = vector.load %arg4[%c0_1, %c0_2] : memref<3x64xbf16, #tpu.memory_space<vmem>>, vector<3x64xbf16>
    %c0_3 = arith.constant 0 : index
    %c0_4 = arith.constant 0 : index
    %2 = vector.load %arg3[%c0_3, %c0_4] : memref<64x1xf32, #tpu.memory_space<vmem>>, vector<64x1xf32>
    %c0_5 = arith.constant 0 : index
    %c0_6 = arith.constant 0 : index
    %3 = vector.load %arg5[%c0_5, %c0_6] : memref<3x1xf32, #tpu.memory_space<vmem>>, vector<3x1xf32>
    %c0_7 = arith.constant 0 : index
    %c0_8 = arith.constant 0 : index
    %c0_9 = arith.constant 0 : index
    %4 = vector.load %arg1[%c0_7, %c0_8, %c0_9] : memref<2x2048x64xf32, #tpu.memory_space<vmem>>, vector<1x2048x64xf32>
    %5 = vector.shape_cast %4 : vector<1x2048x64xf32> to vector<2048x64xf32>
    %6 = arith.truncf %5 : vector<2048x64xf32> to vector<2048x64xbf16>
    %cst = arith.constant dense<0.000000e+00> : vector<64x64xf32>
    %7 = tpu.matmul %0, %6, %cst {dimension_numbers = #tpu.dot_dimension_numbers<[1], [0], [0], [1], [0, 0, 1, 1], [], []>} : vector<64x2048xbf16>, vector<2048x64xbf16>, vector<64x64xf32> -> vector<64x64xf32>
    %8 = vector.broadcast %2 : vector<64x1xf32> to vector<64x64xf32>
    %9 = arith.addf %7, %8 : vector<64x64xf32>
    %cst_10 = arith.constant 0.000000e+00 : f32
    %10 = vector.broadcast %cst_10 : f32 to vector<64x64xf32>
    %11 = arith.maximumf %9, %10 : vector<64x64xf32>
    %12 = arith.truncf %11 : vector<64x64xf32> to vector<64x64xbf16>
    %cst_11 = arith.constant dense<0.000000e+00> : vector<3x64xf32>
    %13 = tpu.matmul %1, %12, %cst_11 {dimension_numbers = #tpu.dot_dimension_numbers<[1], [0], [0], [1], [0, 0, 1, 1], [], []>} : vector<3x64xbf16>, vector<64x64xbf16>, vector<3x64xf32> -> vector<3x64xf32>
    %14 = vector.broadcast %3 : vector<3x1xf32> to vector<3x64xf32>
    %15 = arith.addf %13, %14 : vector<3x64xf32>
    %cst_12 = arith.constant dense<0xFF800000> : vector<3xf32>
    %16 = vector.multi_reduction <maximumf>, %15, %cst_12 [1] : vector<3x64xf32> to vector<3xf32>
    %17 = vector.shape_cast %16 : vector<3xf32> to vector<3x1xf32>
    %18 = vector.broadcast %17 : vector<3x1xf32> to vector<3x64xf32>
    %19 = arith.subf %15, %18 : vector<3x64xf32>
    %20 = math.exp %19 : vector<3x64xf32>
    %cst_13 = arith.constant dense<0.000000e+00> : vector<3xf32>
    %21 = vector.multi_reduction <add>, %20, %cst_13 [1] : vector<3x64xf32> to vector<3xf32>
    %22 = vector.shape_cast %21 : vector<3xf32> to vector<3x1xf32>
    %23 = vector.broadcast %22 : vector<3x1xf32> to vector<3x64xf32>
    %24 = arith.divf %20, %23 : vector<3x64xf32>
    %c0_14 = arith.constant 0 : index
    %c0_15 = arith.constant 0 : index
    %c0_16 = arith.constant 0 : index
    %25 = vector.load %arg6[%c0_14, %c0_15, %c0_16] : memref<2x3x64xf32, #tpu.memory_space<vmem>>, vector<1x3x64xf32>
    %26 = vector.shape_cast %25 : vector<1x3x64xf32> to vector<3x64xf32>
    %27 = vector.shape_cast %24 : vector<3x64xf32> to vector<1x3x64xf32>
    tpu.vector_store %arg6[%c0_14, %c0_15, %c0_16], %27 {strides = array<i32>} : memref<2x3x64xf32, #tpu.memory_space<vmem>>, vector<1x3x64xf32>,
    %c1 = arith.constant 1 : index
    %c0_17 = arith.constant 0 : index
    %c0_18 = arith.constant 0 : index
    %28 = vector.load %arg1[%c1, %c0_17, %c0_18] : memref<2x2048x64xf32, #tpu.memory_space<vmem>>, vector<1x2048x64xf32>
    %29 = vector.shape_cast %28 : vector<1x2048x64xf32> to vector<2048x64xf32>
    %30 = arith.truncf %29 : vector<2048x64xf32> to vector<2048x64xbf16>
    %cst_19 = arith.constant dense<0.000000e+00> : vector<64x64xf32>
    %31 = tpu.matmul %0, %30, %cst_19 {dimension_numbers = #tpu.dot_dimension_numbers<[1], [0], [0], [1], [0, 0, 1, 1], [], []>} : vector<64x2048xbf16>, vector<2048x64xbf16>, vector<64x64xf32> -> vector<64x64xf32>
    %32 = vector.broadcast %2 : vector<64x1xf32> to vector<64x64xf32>
    %33 = arith.addf %31, %32 : vector<64x64xf32>
    %cst_20 = arith.constant 0.000000e+00 : f32
    %34 = vector.broadcast %cst_20 : f32 to vector<64x64xf32>
    %35 = arith.maximumf %33, %34 : vector<64x64xf32>
    %36 = arith.truncf %35 : vector<64x64xf32> to vector<64x64xbf16>
    %cst_21 = arith.constant dense<0.000000e+00> : vector<3x64xf32>
    %37 = tpu.matmul %1, %36, %cst_21 {dimension_numbers = #tpu.dot_dimension_numbers<[1], [0], [0], [1], [0, 0, 1, 1], [], []>} : vector<3x64xbf16>, vector<64x64xbf16>, vector<3x64xf32> -> vector<3x64xf32>
    %38 = vector.broadcast %3 : vector<3x1xf32> to vector<3x64xf32>
    %39 = arith.addf %37, %38 : vector<3x64xf32>
    %cst_22 = arith.constant dense<0xFF800000> : vector<3xf32>
    %40 = vector.multi_reduction <maximumf>, %39, %cst_22 [1] : vector<3x64xf32> to vector<3xf32>
    %41 = vector.shape_cast %40 : vector<3xf32> to vector<3x1xf32>
    %42 = vector.broadcast %41 : vector<3x1xf32> to vector<3x64xf32>
    %43 = arith.subf %39, %42 : vector<3x64xf32>
    %44 = math.exp %43 : vector<3x64xf32>
    %cst_23 = arith.constant dense<0.000000e+00> : vector<3xf32>
    %45 = vector.multi_reduction <add>, %44, %cst_23 [1] : vector<3x64xf32> to vector<3xf32>
    %46 = vector.shape_cast %45 : vector<3xf32> to vector<3x1xf32>
    %47 = vector.broadcast %46 : vector<3x1xf32> to vector<3x64xf32>
    %48 = arith.divf %44, %47 : vector<3x64xf32>
    %c1_24 = arith.constant 1 : index
    %c0_25 = arith.constant 0 : index
    %c0_26 = arith.constant 0 : index
    %49 = vector.load %arg6[%c1_24, %c0_25, %c0_26] : memref<2x3x64xf32, #tpu.memory_space<vmem>>, vector<1x3x64xf32>
    %50 = vector.shape_cast %49 : vector<1x3x64xf32> to vector<3x64xf32>
    %51 = vector.shape_cast %48 : vector<3x64xf32> to vector<1x3x64xf32>
    tpu.vector_store %arg6[%c1_24, %c0_25, %c0_26], %51 {strides = array<i32>} : memref<2x3x64xf32, #tpu.memory_space<vmem>>, vector<1x3x64xf32>,
    return
  }
  func.func @transform_0(%arg0: i32) -> (i32, i32, i32) {
    %c0_i32 = arith.constant 0 : i32
    %c0_i32_0 = arith.constant 0 : i32
    %c0_i32_1 = arith.constant 0 : i32
    return %arg0, %c0_i32, %c0_i32_0 : i32, i32, i32
  }
  func.func @transform_1(%arg0: i32) -> (i32, i32) {
    %c0_i32 = arith.constant 0 : i32
    %c0_i32_0 = arith.constant 0 : i32
    %c0_i32_1 = arith.constant 0 : i32
    return %c0_i32, %c0_i32_0 : i32, i32
  }
  func.func @transform_2(%arg0: i32) -> (i32, i32) {
    %c0_i32 = arith.constant 0 : i32
    %c0_i32_0 = arith.constant 0 : i32
    %c0_i32_1 = arith.constant 0 : i32
    return %c0_i32, %c0_i32_0 : i32, i32
  }
  func.func @transform_3(%arg0: i32) -> (i32, i32) {
    %c0_i32 = arith.constant 0 : i32
    %c0_i32_0 = arith.constant 0 : i32
    %c0_i32_1 = arith.constant 0 : i32
    return %c0_i32, %c0_i32_0 : i32, i32
  }
  func.func @transform_4(%arg0: i32) -> (i32, i32) {
    %c0_i32 = arith.constant 0 : i32
    %c0_i32_0 = arith.constant 0 : i32
    %c0_i32_1 = arith.constant 0 : i32
    return %c0_i32, %c0_i32_0 : i32, i32
  }
  func.func @transform_5(%arg0: i32) -> (i32, i32, i32) {
    %c0_i32 = arith.constant 0 : i32
    %c0_i32_0 = arith.constant 0 : i32
    %c0_i32_1 = arith.constant 0 : i32
    return %arg0, %c0_i32, %c0_i32_0 : i32, i32, i32
  }
}

</mosaic_0001>

<llo_original>
// kernel: tpu_custom_call.1
$region0: #{tpu_custom_call.1}
  #allocation0 [shape = 'u32[]', space=smem, size = 0x4, offset = 0x4, fixed_abs, tag = 'smem constant byte address 0x4 - core index']
  #allocation1 [shape = 'u32[144,128]{1,0:T(1,128)}', space=vmem, size = 0x12000, scoped, tag = 'internal scratch']
  %s0 = inlined_call_operand.vmem [shape: f32[2,2048,64], index: 0, kind: input, shape index: {}]
  %s1 = inlined_call_operand.vmem [shape: bf16[64,2048], index: 1, kind: input, shape index: {}]
  %s2 = inlined_call_operand.vmem [shape: f32[64,1], index: 2, kind: input, shape index: {}]
  %s3 = inlined_call_operand.vmem [shape: bf16[3,64], index: 3, kind: input, shape index: {}]
  %s4 = inlined_call_operand.vmem [shape: f32[3,1], index: 4, kind: input, shape index: {}]
  %s5 = inlined_call_operand.vmem [shape: f32[2,3,64], index: 5, kind: output, shape index: {}]
  %s6 = sld [smem:[#allocation0]]
  $region30: #{tpu_custom_call.1} parent=0
    _
  %s8 = ssub.s32 1, %s6
  %s9 = scalar_select 0, %s8, %s6
  // Predicated region
  $region2: #{tpu_custom_call.1} parent=0 // pred_check
    _
  $region3: #{tpu_custom_call.1} parent=0 // pred_check_branch
    %11 = sbr.rel (0) target = $region5
  $region4: #{tpu_custom_call.1} parent=0 // pred_region
    _
  $region5: #{tpu_custom_call.1} parent=0 // pred_fallthru
    _
  // Predicated region
  $region6: #{tpu_custom_call.1} parent=0 // pred_check
    _
  $region7: #{tpu_custom_call.1} parent=0 // pred_check_branch
    %13 = sbr.rel (0) target = $region9
  $region8: #{tpu_custom_call.1} parent=0 // pred_region
    _
  $region9: #{tpu_custom_call.1} parent=0 // pred_fallthru
    _
  // Predicated region
  $region10: #{tpu_custom_call.1} parent=0 // pred_check
    _
  $region11: #{tpu_custom_call.1} parent=0 // pred_check_branch
    %15 = sbr.rel (0) target = $region13
  $region12: #{tpu_custom_call.1} parent=0 // pred_region
    _
  $region13: #{tpu_custom_call.1} parent=0 // pred_fallthru
    _
  // Predicated region
  $region14: #{tpu_custom_call.1} parent=0 // pred_check
    _
  $region15: #{tpu_custom_call.1} parent=0 // pred_check_branch
    %17 = sbr.rel (0) target = $region17
  $region16: #{tpu_custom_call.1} parent=0 // pred_region
    _
  $region17: #{tpu_custom_call.1} parent=0 // pred_fallthru
    _
  // Predicated region
  $region18: #{tpu_custom_call.1} parent=0 // pred_check
    _
  $region19: #{tpu_custom_call.1} parent=0 // pred_check_branch
    %19 = sbr.rel (0) target = $region21
  $region20: #{tpu_custom_call.1} parent=0 // pred_region
    _
  $region21: #{tpu_custom_call.1} parent=0 // pred_fallthru
    _
  %v21 = vld [vmem:[%s1] sm:$0xff]
  %v22 = vld [vmem:[%s1 + $0x8] sm:$0xff]
  %v23 = vld [vmem:[%s1 + $0x10] sm:$0xff]
  %v24 = vld [vmem:[%s1 + $0x18] sm:$0xff]
  %v25 = vld [vmem:[%s1 + $0x20] sm:$0xff]
  %v26 = vld [vmem:[%s1 + $0x28] sm:$0xff]
  %v27 = vld [vmem:[%s1 + $0x30] sm:$0xff]
  %v28 = vld [vmem:[%s1 + $0x38] sm:$0xff]
  %v29 = vld [vmem:[%s1 + $0x40] sm:$0xff]
  %v30 = vld [vmem:[%s1 + $0x48] sm:$0xff]
  %v31 = vld [vmem:[%s1 + $0x50] sm:$0xff]
  %v32 = vld [vmem:[%s1 + $0x58] sm:$0xff]
  %v33 = vld [vmem:[%s1 + $0x60] sm:$0xff]
  %v34 = vld [vmem:[%s1 + $0x68] sm:$0xff]
  %v35 = vld [vmem:[%s1 + $0x70] sm:$0xff]
  %v36 = vld [vmem:[%s1 + $0x78] sm:$0xff]
  %v37 = vld [vmem:[%s1 + $0x80] sm:$0xff]
  %v38 = vld [vmem:[%s1 + $0x88] sm:$0xff]
  %v39 = vld [vmem:[%s1 + $0x90] sm:$0xff]
  %v40 = vld [vmem:[%s1 + $0x98] sm:$0xff]
  %v41 = vld [vmem:[%s1 + $0xa0] sm:$0xff]
  %v42 = vld [vmem:[%s1 + $0xa8] sm:$0xff]
  %v43 = vld [vmem:[%s1 + $0xb0] sm:$0xff]
  %v44 = vld [vmem:[%s1 + $0xb8] sm:$0xff]
  %v45 = vld [vmem:[%s1 + $0xc0] sm:$0xff]
  %v46 = vld [vmem:[%s1 + $0xc8] sm:$0xff]
  %v47 = vld [vmem:[%s1 + $0xd0] sm:$0xff]
  %v48 = vld [vmem:[%s1 + $0xd8] sm:$0xff]
  %v49 = vld [vmem:[%s1 + $0xe0] sm:$0xff]
  %v50 = vld [vmem:[%s1 + $0xe8] sm:$0xff]
  %v51 = vld [vmem:[%s1 + $0xf0] sm:$0xff]
  %v52 = vld [vmem:[%s1 + $0xf8] sm:$0xff]
  %v53 = vld [vmem:[%s1 + $0x100] sm:$0xff]
  %v54 = vld [vmem:[%s1 + $0x108] sm:$0xff]
  %v55 = vld [vmem:[%s1 + $0x110] sm:$0xff]
  %v56 = vld [vmem:[%s1 + $0x118] sm:$0xff]
  %v57 = vld [vmem:[%s1 + $0x120] sm:$0xff]
  %v58 = vld [vmem:[%s1 + $0x128] sm:$0xff]
  %v59 = vld [vmem:[%s1 + $0x130] sm:$0xff]
  %v60 = vld [vmem:[%s1 + $0x138] sm:$0xff]
  %v61 = vld [vmem:[%s1 + $0x140] sm:$0xff]
  %v62 = vld [vmem:[%s1 + $0x148] sm:$0xff]
  %v63 = vld [vmem:[%s1 + $0x150] sm:$0xff]
  %v64 = vld [vmem:[%s1 + $0x158] sm:$0xff]
  %v65 = vld [vmem:[%s1 + $0x160] sm:$0xff]
  %v66 = vld [vmem:[%s1 + $0x168] sm:$0xff]
  %v67 = vld [vmem:[%s1 + $0x170] sm:$0xff]
  %v68 = vld [vmem:[%s1 + $0x178] sm:$0xff]
  %v69 = vld [vmem:[%s1 + $0x180] sm:$0xff]
  %v70 = vld [vmem:[%s1 + $0x188] sm:$0xff]
  %v71 = vld [vmem:[%s1 + $0x190] sm:$0xff]
  %v72 = vld [vmem:[%s1 + $0x198] sm:$0xff]
  %v73 = vld [vmem:[%s1 + $0x1a0] sm:$0xff]
  %v74 = vld [vmem:[%s1 + $0x1a8] sm:$0xff]
  %v75 = vld [vmem:[%s1 + $0x1b0] sm:$0xff]
  %v76 = vld [vmem:[%s1 + $0x1b8] sm:$0xff]
  %v77 = vld [vmem:[%s1 + $0x1c0] sm:$0xff]
  %v78 = vld [vmem:[%s1 + $0x1c8] sm:$0xff]
  %v79 = vld [vmem:[%s1 + $0x1d0] sm:$0xff]
  %v80 = vld [vmem:[%s1 + $0x1d8] sm:$0xff]
  %v81 = vld [vmem:[%s1 + $0x1e0] sm:$0xff]
  %v82 = vld [vmem:[%s1 + $0x1e8] sm:$0xff]
  %v83 = vld [vmem:[%s1 + $0x1f0] sm:$0xff]
  %v84 = vld [vmem:[%s1 + $0x1f8] sm:$0xff]
  %v85 = vld [vmem:[%s3] sm:$0x3]
  %v86 = vld [vmem:[%s2] sm:$0xff]
  %v87 = vld [vmem:[%s2 + $0x8] sm:$0xff]
  %v88 = vld [vmem:[%s2 + $0x10] sm:$0xff]
  %v89 = vld [vmem:[%s2 + $0x18] sm:$0xff]
  %v90 = vld [vmem:[%s2 + $0x20] sm:$0xff]
  %v91 = vld [vmem:[%s2 + $0x28] sm:$0xff]
  %v92 = vld [vmem:[%s2 + $0x30] sm:$0xff]
  %v93 = vld [vmem:[%s2 + $0x38] sm:$0xff]
  %v94 = vld [vmem:[%s4] sm:$0x7]
  %v95 = vld [vmem:[%s0] sm:$0xff]
  %v96 = vld [vmem:[%s0 + $0x8] sm:$0xff]
  %v97 = vld [vmem:[%s0 + $0x10] sm:$0xff]
  %v98 = vld [vmem:[%s0 + $0x18] sm:$0xff]
  %v99 = vld [vmem:[%s0 + $0x20] sm:$0xff]
  %v100 = vld [vmem:[%s0 + $0x28] sm:$0xff]
  %v101 = vld [vmem:[%s0 + $0x30] sm:$0xff]
  %v102 = vld [vmem:[%s0 + $0x38] sm:$0xff]
  %v103 = vld [vmem:[%s0 + $0x40] sm:$0xff]
  %v104 = vld [vmem:[%s0 + $0x48] sm:$0xff]
  %v105 = vld [vmem:[%s0 + $0x50] sm:$0xff]
  %v106 = vld [vmem:[%s0 + $0x58] sm:$0xff]
  %v107 = vld [vmem:[%s0 + $0x60] sm:$0xff]
  %v108 = vld [vmem:[%s0 + $0x68] sm:$0xff]
  %v109 = vld [vmem:[%s0 + $0x70] sm:$0xff]
  %v110 = vld [vmem:[%s0 + $0x78] sm:$0xff]
  %v111 = vld [vmem:[%s0 + $0x80] sm:$0xff]
  %v112 = vld [vmem:[%s0 + $0x88] sm:$0xff]
  %v113 = vld [vmem:[%s0 + $0x90] sm:$0xff]
  %v114 = vld [vmem:[%s0 + $0x98] sm:$0xff]
  %v115 = vld [vmem:[%s0 + $0xa0] sm:$0xff]
  %v116 = vld [vmem:[%s0 + $0xa8] sm:$0xff]
  %v117 = vld [vmem:[%s0 + $0xb0] sm:$0xff]
  %v118 = vld [vmem:[%s0 + $0xb8] sm:$0xff]
  %v119 = vld [vmem:[%s0 + $0xc0] sm:$0xff]
  %v120 = vld [vmem:[%s0 + $0xc8] sm:$0xff]
  %v121 = vld [vmem:[%s0 + $0xd0] sm:$0xff]
  %v122 = vld [vmem:[%s0 + $0xd8] sm:$0xff]
  %v123 = vld [vmem:[%s0 + $0xe0] sm:$0xff]
  %v124 = vld [vmem:[%s0 + $0xe8] sm:$0xff]
  %v125 = vld [vmem:[%s0 + $0xf0] sm:$0xff]
  %v126 = vld [vmem:[%s0 + $0xf8] sm:$0xff]
  %v127 = vld [vmem:[%s0 + $0x100] sm:$0xff]
  %v128 = vld [vmem:[%s0 + $0x108] sm:$0xff]
  %v129 = vld [vmem:[%s0 + $0x110] sm:$0xff]
  %v130 = vld [vmem:[%s0 + $0x118] sm:$0xff]
  %v131 = vld [vmem:[%s0 + $0x120] sm:$0xff]
  %v132 = vld [vmem:[%s0 + $0x128] sm:$0xff]
  %v133 = vld [vmem:[%s0 + $0x130] sm:$0xff]
  %v134 = vld [vmem:[%s0 + $0x138] sm:$0xff]
  %v135 = vld [vmem:[%s0 + $0x140] sm:$0xff]
  %v136 = vld [vmem:[%s0 + $0x148] sm:$0xff]
  %v137 = vld [vmem:[%s0 + $0x150] sm:$0xff]
  %v138 = vld [vmem:[%s0 + $0x158] sm:$0xff]
  %v139 = vld [vmem:[%s0 + $0x160] sm:$0xff]
  %v140 = vld [vmem:[%s0 + $0x168] sm:$0xff]
  %v141 = vld [vmem:[%s0 + $0x170] sm:$0xff]
  %v142 = vld [vmem:[%s0 + $0x178] sm:$0xff]
  %v143 = vld [vmem:[%s0 + $0x180] sm:$0xff]
  %v144 = vld [vmem:[%s0 + $0x188] sm:$0xff]
  %v145 = vld [vmem:[%s0 + $0x190] sm:$0xff]
  %v146 = vld [vmem:[%s0 + $0x198] sm:$0xff]
  %v147 = vld [vmem:[%s0 + $0x1a0] sm:$0xff]
  %v148 = vld [vmem:[%s0 + $0x1a8] sm:$0xff]
  %v149 = vld [vmem:[%s0 + $0x1b0] sm:$0xff]
  %v150 = vld [vmem:[%s0 + $0x1b8] sm:$0xff]
  %v151 = vld [vmem:[%s0 + $0x1c0] sm:$0xff]
  %v152 = vld [vmem:[%s0 + $0x1c8] sm:$0xff]
  %v153 = vld [vmem:[%s0 + $0x1d0] sm:$0xff]
  %v154 = vld [vmem:[%s0 + $0x1d8] sm:$0xff]
  %v155 = vld [vmem:[%s0 + $0x1e0] sm:$0xff]
  %v156 = vld [vmem:[%s0 + $0x1e8] sm:$0xff]
  %v157 = vld [vmem:[%s0 + $0x1f0] sm:$0xff]
  %v158 = vld [vmem:[%s0 + $0x1f8] sm:$0xff]
  %v159 = vld [vmem:[%s0 + $0x200] sm:$0xff]
  %v160 = vld [vmem:[%s0 + $0x208] sm:$0xff]
  %v161 = vld [vmem:[%s0 + $0x210] sm:$0xff]
  %v162 = vld [vmem:[%s0 + $0x218] sm:$0xff]
  %v163 = vld [vmem:[%s0 + $0x220] sm:$0xff]
  %v164 = vld [vmem:[%s0 + $0x228] sm:$0xff]
  %v165 = vld [vmem:[%s0 + $0x230] sm:$0xff]
  %v166 = vld [vmem:[%s0 + $0x238] sm:$0xff]
  %v167 = vld [vmem:[%s0 + $0x240] sm:$0xff]
  %v168 = vld [vmem:[%s0 + $0x248] sm:$0xff]
  %v169 = vld [vmem:[%s0 + $0x250] sm:$0xff]
  %v170 = vld [vmem:[%s0 + $0x258] sm:$0xff]
  %v171 = vld [vmem:[%s0 + $0x260] sm:$0xff]
  %v172 = vld [vmem:[%s0 + $0x268] sm:$0xff]
  %v173 = vld [vmem:[%s0 + $0x270] sm:$0xff]
  %v174 = vld [vmem:[%s0 + $0x278] sm:$0xff]
  %v175 = vld [vmem:[%s0 + $0x280] sm:$0xff]
  %v176 = vld [vmem:[%s0 + $0x288] sm:$0xff]
  %v177 = vld [vmem:[%s0 + $0x290] sm:$0xff]
  %v178 = vld [vmem:[%s0 + $0x298] sm:$0xff]
  %v179 = vld [vmem:[%s0 + $0x2a0] sm:$0xff]
  %v180 = vld [vmem:[%s0 + $0x2a8] sm:$0xff]
  %v181 = vld [vmem:[%s0 + $0x2b0] sm:$0xff]
  %v182 = vld [vmem:[%s0 + $0x2b8] sm:$0xff]
  %v183 = vld [vmem:[%s0 + $0x2c0] sm:$0xff]
  %v184 = vld [vmem:[%s0 + $0x2c8] sm:$0xff]
  %v185 = vld [vmem:[%s0 + $0x2d0] sm:$0xff]
  %v186 = vld [vmem:[%s0 + $0x2d8] sm:$0xff]
  %v187 = vld [vmem:[%s0 + $0x2e0] sm:$0xff]
  %v188 = vld [vmem:[%s0 + $0x2e8] sm:$0xff]
  %v189 = vld [vmem:[%s0 + $0x2f0] sm:$0xff]
  %v190 = vld [vmem:[%s0 + $0x2f8] sm:$0xff]
  %v191 = vld [vmem:[%s0 + $0x300] sm:$0xff]
  %v192 = vld [vmem:[%s0 + $0x308] sm:$0xff]
  %v193 = vld [vmem:[%s0 + $0x310] sm:$0xff]
  %v194 = vld [vmem:[%s0 + $0x318] sm:$0xff]
  %v195 = vld [vmem:[%s0 + $0x320] sm:$0xff]
  %v196 = vld [vmem:[%s0 + $0x328] sm:$0xff]
  %v197 = vld [vmem:[%s0 + $0x330] sm:$0xff]
  %v198 = vld [vmem:[%s0 + $0x338] sm:$0xff]
  %v199 = vld [vmem:[%s0 + $0x340] sm:$0xff]
  %v200 = vld [vmem:[%s0 + $0x348] sm:$0xff]
  %v201 = vld [vmem:[%s0 + $0x350] sm:$0xff]
  %v202 = vld [vmem:[%s0 + $0x358] sm:$0xff]
  %v203 = vld [vmem:[%s0 + $0x360] sm:$0xff]
  %v204 = vld [vmem:[%s0 + $0x368] sm:$0xff]
  %v205 = vld [vmem:[%s0 + $0x370] sm:$0xff]
  %v206 = vld [vmem:[%s0 + $0x378] sm:$0xff]
  %v207 = vld [vmem:[%s0 + $0x380] sm:$0xff]
  %v208 = vld [vmem:[%s0 + $0x388] sm:$0xff]
  %v209 = vld [vmem:[%s0 + $0x390] sm:$0xff]
  %v210 = vld [vmem:[%s0 + $0x398] sm:$0xff]
  %v211 = vld [vmem:[%s0 + $0x3a0] sm:$0xff]
  %v212 = vld [vmem:[%s0 + $0x3a8] sm:$0xff]
  %v213 = vld [vmem:[%s0 + $0x3b0] sm:$0xff]
  %v214 = vld [vmem:[%s0 + $0x3b8] sm:$0xff]
  %v215 = vld [vmem:[%s0 + $0x3c0] sm:$0xff]
  %v216 = vld [vmem:[%s0 + $0x3c8] sm:$0xff]
  %v217 = vld [vmem:[%s0 + $0x3d0] sm:$0xff]
  %v218 = vld [vmem:[%s0 + $0x3d8] sm:$0xff]
  %v219 = vld [vmem:[%s0 + $0x3e0] sm:$0xff]
  %v220 = vld [vmem:[%s0 + $0x3e8] sm:$0xff]
  %v221 = vld [vmem:[%s0 + $0x3f0] sm:$0xff]
  %v222 = vld [vmem:[%s0 + $0x3f8] sm:$0xff]
  %v223 = vld [vmem:[%s0 + $0x400] sm:$0xff]
  %v224 = vld [vmem:[%s0 + $0x408] sm:$0xff]
  %v225 = vld [vmem:[%s0 + $0x410] sm:$0xff]
  %v226 = vld [vmem:[%s0 + $0x418] sm:$0xff]
  %v227 = vld [vmem:[%s0 + $0x420] sm:$0xff]
  %v228 = vld [vmem:[%s0 + $0x428] sm:$0xff]
  %v229 = vld [vmem:[%s0 + $0x430] sm:$0xff]
  %v230 = vld [vmem:[%s0 + $0x438] sm:$0xff]
  %v231 = vld [vmem:[%s0 + $0x440] sm:$0xff]
  %v232 = vld [vmem:[%s0 + $0x448] sm:$0xff]
  %v233 = vld [vmem:[%s0 + $0x450] sm:$0xff]
  %v234 = vld [vmem:[%s0 + $0x458] sm:$0xff]
  %v235 = vld [vmem:[%s0 + $0x460] sm:$0xff]
  %v236 = vld [vmem:[%s0 + $0x468] sm:$0xff]
  %v237 = vld [vmem:[%s0 + $0x470] sm:$0xff]
  %v238 = vld [vmem:[%s0 + $0x478] sm:$0xff]
  %v239 = vld [vmem:[%s0 + $0x480] sm:$0xff]
  %v240 = vld [vmem:[%s0 + $0x488] sm:$0xff]
  %v241 = vld [vmem:[%s0 + $0x490] sm:$0xff]
  %v242 = vld [vmem:[%s0 + $0x498] sm:$0xff]
  %v243 = vld [vmem:[%s0 + $0x4a0] sm:$0xff]
  %v244 = vld [vmem:[%s0 + $0x4a8] sm:$0xff]
  %v245 = vld [vmem:[%s0 + $0x4b0] sm:$0xff]
  %v246 = vld [vmem:[%s0 + $0x4b8] sm:$0xff]
  %v247 = vld [vmem:[%s0 + $0x4c0] sm:$0xff]
  %v248 = vld [vmem:[%s0 + $0x4c8] sm:$0xff]
  %v249 = vld [vmem:[%s0 + $0x4d0] sm:$0xff]
  %v250 = vld [vmem:[%s0 + $0x4d8] sm:$0xff]
  %v251 = vld [vmem:[%s0 + $0x4e0] sm:$0xff]
  %v252 = vld [vmem:[%s0 + $0x4e8] sm:$0xff]
  %v253 = vld [vmem:[%s0 + $0x4f0] sm:$0xff]
  %v254 = vld [vmem:[%s0 + $0x4f8] sm:$0xff]
  %v255 = vld [vmem:[%s0 + $0x500] sm:$0xff]
  %v256 = vld [vmem:[%s0 + $0x508] sm:$0xff]
  %v257 = vld [vmem:[%s0 + $0x510] sm:$0xff]
  %v258 = vld [vmem:[%s0 + $0x518] sm:$0xff]
  %v259 = vld [vmem:[%s0 + $0x520] sm:$0xff]
  %v260 = vld [vmem:[%s0 + $0x528] sm:$0xff]
  %v261 = vld [vmem:[%s0 + $0x530] sm:$0xff]
  %v262 = vld [vmem:[%s0 + $0x538] sm:$0xff]
  %v263 = vld [vmem:[%s0 + $0x540] sm:$0xff]
  %v264 = vld [vmem:[%s0 + $0x548] sm:$0xff]
  %v265 = vld [vmem:[%s0 + $0x550] sm:$0xff]
  %v266 = vld [vmem:[%s0 + $0x558] sm:$0xff]
  %v267 = vld [vmem:[%s0 + $0x560] sm:$0xff]
  %v268 = vld [vmem:[%s0 + $0x568] sm:$0xff]
  %v269 = vld [vmem:[%s0 + $0x570] sm:$0xff]
  %v270 = vld [vmem:[%s0 + $0x578] sm:$0xff]
  %v271 = vld [vmem:[%s0 + $0x580] sm:$0xff]
  %v272 = vld [vmem:[%s0 + $0x588] sm:$0xff]
  %v273 = vld [vmem:[%s0 + $0x590] sm:$0xff]
  %v274 = vld [vmem:[%s0 + $0x598] sm:$0xff]
  %v275 = vld [vmem:[%s0 + $0x5a0] sm:$0xff]
  %v276 = vld [vmem:[%s0 + $0x5a8] sm:$0xff]
  %v277 = vld [vmem:[%s0 + $0x5b0] sm:$0xff]
  %v278 = vld [vmem:[%s0 + $0x5b8] sm:$0xff]
  %v279 = vld [vmem:[%s0 + $0x5c0] sm:$0xff]
  %v280 = vld [vmem:[%s0 + $0x5c8] sm:$0xff]
  %v281 = vld [vmem:[%s0 + $0x5d0] sm:$0xff]
  %v282 = vld [vmem:[%s0 + $0x5d8] sm:$0xff]
  %v283 = vld [vmem:[%s0 + $0x5e0] sm:$0xff]
  %v284 = vld [vmem:[%s0 + $0x5e8] sm:$0xff]
  %v285 = vld [vmem:[%s0 + $0x5f0] sm:$0xff]
  %v286 = vld [vmem:[%s0 + $0x5f8] sm:$0xff]
  %v287 = vld [vmem:[%s0 + $0x600] sm:$0xff]
  %v288 = vld [vmem:[%s0 + $0x608] sm:$0xff]
  %v289 = vld [vmem:[%s0 + $0x610] sm:$0xff]
  %v290 = vld [vmem:[%s0 + $0x618] sm:$0xff]
  %v291 = vld [vmem:[%s0 + $0x620] sm:$0xff]
  %v292 = vld [vmem:[%s0 + $0x628] sm:$0xff]
  %v293 = vld [vmem:[%s0 + $0x630] sm:$0xff]
  %v294 = vld [vmem:[%s0 + $0x638] sm:$0xff]
  %v295 = vld [vmem:[%s0 + $0x640] sm:$0xff]
  %v296 = vld [vmem:[%s0 + $0x648] sm:$0xff]
  %v297 = vld [vmem:[%s0 + $0x650] sm:$0xff]
  %v298 = vld [vmem:[%s0 + $0x658] sm:$0xff]
  %v299 = vld [vmem:[%s0 + $0x660] sm:$0xff]
  %v300 = vld [vmem:[%s0 + $0x668] sm:$0xff]
  %v301 = vld [vmem:[%s0 + $0x670] sm:$0xff]
  %v302 = vld [vmem:[%s0 + $0x678] sm:$0xff]
  %v303 = vld [vmem:[%s0 + $0x680] sm:$0xff]
  %v304 = vld [vmem:[%s0 + $0x688] sm:$0xff]
  %v305 = vld [vmem:[%s0 + $0x690] sm:$0xff]
  %v306 = vld [vmem:[%s0 + $0x698] sm:$0xff]
  %v307 = vld [vmem:[%s0 + $0x6a0] sm:$0xff]
  %v308 = vld [vmem:[%s0 + $0x6a8] sm:$0xff]
  %v309 = vld [vmem:[%s0 + $0x6b0] sm:$0xff]
  %v310 = vld [vmem:[%s0 + $0x6b8] sm:$0xff]
  %v311 = vld [vmem:[%s0 + $0x6c0] sm:$0xff]
  %v312 = vld [vmem:[%s0 + $0x6c8] sm:$0xff]
  %v313 = vld [vmem:[%s0 + $0x6d0] sm:$0xff]
  %v314 = vld [vmem:[%s0 + $0x6d8] sm:$0xff]
  %v315 = vld [vmem:[%s0 + $0x6e0] sm:$0xff]
  %v316 = vld [vmem:[%s0 + $0x6e8] sm:$0xff]
  %v317 = vld [vmem:[%s0 + $0x6f0] sm:$0xff]
  %v318 = vld [vmem:[%s0 + $0x6f8] sm:$0xff]
  %v319 = vld [vmem:[%s0 + $0x700] sm:$0xff]
  %v320 = vld [vmem:[%s0 + $0x708] sm:$0xff]
  %v321 = vld [vmem:[%s0 + $0x710] sm:$0xff]
  %v322 = vld [vmem:[%s0 + $0x718] sm:$0xff]
  %v323 = vld [vmem:[%s0 + $0x720] sm:$0xff]
  %v324 = vld [vmem:[%s0 + $0x728] sm:$0xff]
  %v325 = vld [vmem:[%s0 + $0x730] sm:$0xff]
  %v326 = vld [vmem:[%s0 + $0x738] sm:$0xff]
  %v327 = vld [vmem:[%s0 + $0x740] sm:$0xff]
  %v328 = vld [vmem:[%s0 + $0x748] sm:$0xff]
  %v329 = vld [vmem:[%s0 + $0x750] sm:$0xff]
  %v330 = vld [vmem:[%s0 + $0x758] sm:$0xff]
  %v331 = vld [vmem:[%s0 + $0x760] sm:$0xff]
  %v332 = vld [vmem:[%s0 + $0x768] sm:$0xff]
  %v333 = vld [vmem:[%s0 + $0x770] sm:$0xff]
  %v334 = vld [vmem:[%s0 + $0x778] sm:$0xff]
  %v335 = vld [vmem:[%s0 + $0x780] sm:$0xff]
  %v336 = vld [vmem:[%s0 + $0x788] sm:$0xff]
  %v337 = vld [vmem:[%s0 + $0x790] sm:$0xff]
  %v338 = vld [vmem:[%s0 + $0x798] sm:$0xff]
  %v339 = vld [vmem:[%s0 + $0x7a0] sm:$0xff]
  %v340 = vld [vmem:[%s0 + $0x7a8] sm:$0xff]
  %v341 = vld [vmem:[%s0 + $0x7b0] sm:$0xff]
  %v342 = vld [vmem:[%s0 + $0x7b8] sm:$0xff]
  %v343 = vld [vmem:[%s0 + $0x7c0] sm:$0xff]
  %v344 = vld [vmem:[%s0 + $0x7c8] sm:$0xff]
  %v345 = vld [vmem:[%s0 + $0x7d0] sm:$0xff]
  %v346 = vld [vmem:[%s0 + $0x7d8] sm:$0xff]
  %v347 = vld [vmem:[%s0 + $0x7e0] sm:$0xff]
  %v348 = vld [vmem:[%s0 + $0x7e8] sm:$0xff]
  %v349 = vld [vmem:[%s0 + $0x7f0] sm:$0xff]
  %v350 = vld [vmem:[%s0 + $0x7f8] sm:$0xff]
  %v351 = vpack.c.bf16 %v96, %v95
  %v352 = vpack.c.bf16 %v98, %v97
  %v353 = vpack.c.bf16 %v100, %v99
  %v354 = vpack.c.bf16 %v102, %v101
  %v355 = vpack.c.bf16 %v104, %v103
  %v356 = vpack.c.bf16 %v106, %v105
  %v357 = vpack.c.bf16 %v108, %v107
  %v358 = vpack.c.bf16 %v110, %v109
  %v359 = vpack.c.bf16 %v112, %v111
  %v360 = vpack.c.bf16 %v114, %v113
  %v361 = vpack.c.bf16 %v116, %v115
  %v362 = vpack.c.bf16 %v118, %v117
  %v363 = vpack.c.bf16 %v120, %v119
  %v364 = vpack.c.bf16 %v122, %v121
  %v365 = vpack.c.bf16 %v124, %v123
  %v366 = vpack.c.bf16 %v126, %v125
  %v367 = vpack.c.bf16 %v128, %v127
  %v368 = vpack.c.bf16 %v130, %v129
  %v369 = vpack.c.bf16 %v132, %v131
  %v370 = vpack.c.bf16 %v134, %v133
  %v371 = vpack.c.bf16 %v136, %v135
  %v372 = vpack.c.bf16 %v138, %v137
  %v373 = vpack.c.bf16 %v140, %v139
  %v374 = vpack.c.bf16 %v142, %v141
  %v375 = vpack.c.bf16 %v144, %v143
  %v376 = vpack.c.bf16 %v146, %v145
  %v377 = vpack.c.bf16 %v148, %v147
  %v378 = vpack.c.bf16 %v150, %v149
  %v379 = vpack.c.bf16 %v152, %v151
  %v380 = vpack.c.bf16 %v154, %v153
  %v381 = vpack.c.bf16 %v156, %v155
  %v382 = vpack.c.bf16 %v158, %v157
  %v383 = vpack.c.bf16 %v160, %v159
  %v384 = vpack.c.bf16 %v162, %v161
  %v385 = vpack.c.bf16 %v164, %v163
  %v386 = vpack.c.bf16 %v166, %v165
  %v387 = vpack.c.bf16 %v168, %v167
  %v388 = vpack.c.bf16 %v170, %v169
  %v389 = vpack.c.bf16 %v172, %v171
  %v390 = vpack.c.bf16 %v174, %v173
  %v391 = vpack.c.bf16 %v176, %v175
  %v392 = vpack.c.bf16 %v178, %v177
  %v393 = vpack.c.bf16 %v180, %v179
  %v394 = vpack.c.bf16 %v182, %v181
  %v395 = vpack.c.bf16 %v184, %v183
  %v396 = vpack.c.bf16 %v186, %v185
  %v397 = vpack.c.bf16 %v188, %v187
  %v398 = vpack.c.bf16 %v190, %v189
  %v399 = vpack.c.bf16 %v192, %v191
  %v400 = vpack.c.bf16 %v194, %v193
  %v401 = vpack.c.bf16 %v196, %v195
  %v402 = vpack.c.bf16 %v198, %v197
  %v403 = vpack.c.bf16 %v200, %v199
  %v404 = vpack.c.bf16 %v202, %v201
  %v405 = vpack.c.bf16 %v204, %v203
  %v406 = vpack.c.bf16 %v206, %v205
  %v407 = vpack.c.bf16 %v208, %v207
  %v408 = vpack.c.bf16 %v210, %v209
  %v409 = vpack.c.bf16 %v212, %v211
  %v410 = vpack.c.bf16 %v214, %v213
  %v411 = vpack.c.bf16 %v216, %v215
  %v412 = vpack.c.bf16 %v218, %v217
  %v413 = vpack.c.bf16 %v220, %v219
  %v414 = vpack.c.bf16 %v222, %v221
  %v415 = vpack.c.bf16 %v224, %v223
  %v416 = vpack.c.bf16 %v226, %v225
  %v417 = vpack.c.bf16 %v228, %v227
  %v418 = vpack.c.bf16 %v230, %v229
  %v419 = vpack.c.bf16 %v232, %v231
  %v420 = vpack.c.bf16 %v234, %v233
  %v421 = vpack.c.bf16 %v236, %v235
  %v422 = vpack.c.bf16 %v238, %v237
  %v423 = vpack.c.bf16 %v240, %v239
  %v424 = vpack.c.bf16 %v242, %v241
  %v425 = vpack.c.bf16 %v244, %v243
  %v426 = vpack.c.bf16 %v246, %v245
  %v427 = vpack.c.bf16 %v248, %v247
  %v428 = vpack.c.bf16 %v250, %v249
  %v429 = vpack.c.bf16 %v252, %v251
  %v430 = vpack.c.bf16 %v254, %v253
  %v431 = vpack.c.bf16 %v256, %v255
  %v432 = vpack.c.bf16 %v258, %v257
  %v433 = vpack.c.bf16 %v260, %v259
  %v434 = vpack.c.bf16 %v262, %v261
  %v435 = vpack.c.bf16 %v264, %v263
  %v436 = vpack.c.bf16 %v266, %v265
  %v437 = vpack.c.bf16 %v268, %v267
  %v438 = vpack.c.bf16 %v270, %v269
  %v439 = vpack.c.bf16 %v272, %v271
  %v440 = vpack.c.bf16 %v274, %v273
  %v441 = vpack.c.bf16 %v276, %v275
  %v442 = vpack.c.bf16 %v278, %v277
  %v443 = vpack.c.bf16 %v280, %v279
  %v444 = vpack.c.bf16 %v282, %v281
  %v445 = vpack.c.bf16 %v284, %v283
  %v446 = vpack.c.bf16 %v286, %v285
  %v447 = vpack.c.bf16 %v288, %v287
  %v448 = vpack.c.bf16 %v290, %v289
  %v449 = vpack.c.bf16 %v292, %v291
  %v450 = vpack.c.bf16 %v294, %v293
  %v451 = vpack.c.bf16 %v296, %v295
  %v452 = vpack.c.bf16 %v298, %v297
  %v453 = vpack.c.bf16 %v300, %v299
  %v454 = vpack.c.bf16 %v302, %v301
  %v455 = vpack.c.bf16 %v304, %v303
  %v456 = vpack.c.bf16 %v306, %v305
  %v457 = vpack.c.bf16 %v308, %v307
  %v458 = vpack.c.bf16 %v310, %v309
  %v459 = vpack.c.bf16 %v312, %v311
  %v460 = vpack.c.bf16 %v314, %v313
  %v461 = vpack.c.bf16 %v316, %v315
  %v462 = vpack.c.bf16 %v318, %v317
  %v463 = vpack.c.bf16 %v320, %v319
  %v464 = vpack.c.bf16 %v322, %v321
  %v465 = vpack.c.bf16 %v324, %v323
  %v466 = vpack.c.bf16 %v326, %v325
  %v467 = vpack.c.bf16 %v328, %v327
  %v468 = vpack.c.bf16 %v330, %v329
  %v469 = vpack.c.bf16 %v332, %v331
  %v470 = vpack.c.bf16 %v334, %v333
  %v471 = vpack.c.bf16 %v336, %v335
  %v472 = vpack.c.bf16 %v338, %v337
  %v473 = vpack.c.bf16 %v340, %v339
  %v474 = vpack.c.bf16 %v342, %v341
  %v475 = vpack.c.bf16 %v344, %v343
  %v476 = vpack.c.bf16 %v346, %v345
  %v477 = vpack.c.bf16 %v348, %v347
  %v478 = vpack.c.bf16 %v350, %v349
  %480 = vset.pattern.permute.xlu0 0
  %481 = vperm.xlu0 %480, %v86
  %v482 = vpop.permute.xlu0 %481
  %485 = vset.pattern.permute.xlu0 0
  %486 = vperm.xlu0 %485, %v87
  %v487 = vpop.permute.xlu0 %486
  %490 = vset.pattern.permute.xlu0 0
  %491 = vperm.xlu0 %490, %v88
  %v492 = vpop.permute.xlu0 %491
  %495 = vset.pattern.permute.xlu0 0
  %496 = vperm.xlu0 %495, %v89
  %v497 = vpop.permute.xlu0 %496
  %500 = vset.pattern.permute.xlu0 0
  %501 = vperm.xlu0 %500, %v90
  %v502 = vpop.permute.xlu0 %501
  %505 = vset.pattern.permute.xlu0 0
  %506 = vperm.xlu0 %505, %v91
  %v507 = vpop.permute.xlu0 %506
  %510 = vset.pattern.permute.xlu0 0
  %511 = vperm.xlu0 %510, %v92
  %v512 = vpop.permute.xlu0 %511
  %515 = vset.pattern.permute.xlu0 0
  %516 = vperm.xlu0 %515, %v93
  %v517 = vpop.permute.xlu0 %516
  %v583 = vunpack.c.l.b16 %v21
  %v584 = vunpack.c.h.b16 %v21
  %v585 = vunpack.c.l.b16 %v22
  %v586 = vunpack.c.h.b16 %v22
  %v587 = vunpack.c.l.b16 %v23
  %v588 = vunpack.c.h.b16 %v23
  %v589 = vunpack.c.l.b16 %v24
  %v590 = vunpack.c.h.b16 %v24
  %v591 = vunpack.c.l.b16 %v25
  %v592 = vunpack.c.h.b16 %v25
  %v593 = vunpack.c.l.b16 %v26
  %v594 = vunpack.c.h.b16 %v26
  %v595 = vunpack.c.l.b16 %v27
  %v596 = vunpack.c.h.b16 %v27
  %v597 = vunpack.c.l.b16 %v28
  %v598 = vunpack.c.h.b16 %v28
  %v599 = vunpack.c.l.b16 %v29
  %v600 = vunpack.c.h.b16 %v29
  %v601 = vunpack.c.l.b16 %v30
  %v602 = vunpack.c.h.b16 %v30
  %v603 = vunpack.c.l.b16 %v31
  %v604 = vunpack.c.h.b16 %v31
  %v605 = vunpack.c.l.b16 %v32
  %v606 = vunpack.c.h.b16 %v32
  %v607 = vunpack.c.l.b16 %v33
  %v608 = vunpack.c.h.b16 %v33
  %v609 = vunpack.c.l.b16 %v34
  %v610 = vunpack.c.h.b16 %v34
  %v611 = vunpack.c.l.b16 %v35
  %v612 = vunpack.c.h.b16 %v35
  %v613 = vunpack.c.l.b16 %v36
  %v614 = vunpack.c.h.b16 %v36
  %v615 = vunpack.c.l.b16 %v37
  %v616 = vunpack.c.h.b16 %v37
  %v617 = vunpack.c.l.b16 %v38
  %v618 = vunpack.c.h.b16 %v38
  %v619 = vunpack.c.l.b16 %v39
  %v620 = vunpack.c.h.b16 %v39
  %v621 = vunpack.c.l.b16 %v40
  %v622 = vunpack.c.h.b16 %v40
  %v623 = vunpack.c.l.b16 %v41
  %v624 = vunpack.c.h.b16 %v41
  %v625 = vunpack.c.l.b16 %v42
  %v626 = vunpack.c.h.b16 %v42
  %v627 = vunpack.c.l.b16 %v43
  %v628 = vunpack.c.h.b16 %v43
  %v629 = vunpack.c.l.b16 %v44
  %v630 = vunpack.c.h.b16 %v44
  %v631 = vunpack.c.l.b16 %v45
  %v632 = vunpack.c.h.b16 %v45
  %v633 = vunpack.c.l.b16 %v46
  %v634 = vunpack.c.h.b16 %v46
  %v635 = vunpack.c.l.b16 %v47
  %v636 = vunpack.c.h.b16 %v47
  %v637 = vunpack.c.l.b16 %v48
  %v638 = vunpack.c.h.b16 %v48
  %v639 = vunpack.c.l.b16 %v49
  %v640 = vunpack.c.h.b16 %v49
  %v641 = vunpack.c.l.b16 %v50
  %v642 = vunpack.c.h.b16 %v50
  %v643 = vunpack.c.l.b16 %v51
  %v644 = vunpack.c.h.b16 %v51
  %v645 = vunpack.c.l.b16 %v52
  %v646 = vunpack.c.h.b16 %v52
  %v647 = vunpack.c.l.b16 %v53
  %v648 = vunpack.c.h.b16 %v53
  %v649 = vunpack.c.l.b16 %v54
  %v650 = vunpack.c.h.b16 %v54
  %v651 = vunpack.c.l.b16 %v55
  %v652 = vunpack.c.h.b16 %v55
  %v653 = vunpack.c.l.b16 %v56
  %v654 = vunpack.c.h.b16 %v56
  %v655 = vunpack.c.l.b16 %v57
  %v656 = vunpack.c.h.b16 %v57
  %v657 = vunpack.c.l.b16 %v58
  %v658 = vunpack.c.h.b16 %v58
  %v659 = vunpack.c.l.b16 %v59
  %v660 = vunpack.c.h.b16 %v59
  %v661 = vunpack.c.l.b16 %v60
  %v662 = vunpack.c.h.b16 %v60
  %v663 = vunpack.c.l.b16 %v61
  %v664 = vunpack.c.h.b16 %v61
  %v665 = vunpack.c.l.b16 %v62
  %v666 = vunpack.c.h.b16 %v62
  %v667 = vunpack.c.l.b16 %v63
  %v668 = vunpack.c.h.b16 %v63
  %v669 = vunpack.c.l.b16 %v64
  %v670 = vunpack.c.h.b16 %v64
  %v671 = vunpack.c.l.b16 %v65
  %v672 = vunpack.c.h.b16 %v65
  %v673 = vunpack.c.l.b16 %v66
  %v674 = vunpack.c.h.b16 %v66
  %v675 = vunpack.c.l.b16 %v67
  %v676 = vunpack.c.h.b16 %v67
  %v677 = vunpack.c.l.b16 %v68
  %v678 = vunpack.c.h.b16 %v68
  %v679 = vunpack.c.l.b16 %v69
  %v680 = vunpack.c.h.b16 %v69
  %v681 = vunpack.c.l.b16 %v70
  %v682 = vunpack.c.h.b16 %v70
  %v683 = vunpack.c.l.b16 %v71
  %v684 = vunpack.c.h.b16 %v71
  %v685 = vunpack.c.l.b16 %v72
  %v686 = vunpack.c.h.b16 %v72
  %v687 = vunpack.c.l.b16 %v73
  %v688 = vunpack.c.h.b16 %v73
  %v689 = vunpack.c.l.b16 %v74
  %v690 = vunpack.c.h.b16 %v74
  %v691 = vunpack.c.l.b16 %v75
  %v692 = vunpack.c.h.b16 %v75
  %v693 = vunpack.c.l.b16 %v76
  %v694 = vunpack.c.h.b16 %v76
  %v695 = vunpack.c.l.b16 %v77
  %v696 = vunpack.c.h.b16 %v77
  %v697 = vunpack.c.l.b16 %v78
  %v698 = vunpack.c.h.b16 %v78
  %v699 = vunpack.c.l.b16 %v79
  %v700 = vunpack.c.h.b16 %v79
  %v701 = vunpack.c.l.b16 %v80
  %v702 = vunpack.c.h.b16 %v80
  %v703 = vunpack.c.l.b16 %v81
  %v704 = vunpack.c.h.b16 %v81
  %v705 = vunpack.c.l.b16 %v82
  %v706 = vunpack.c.h.b16 %v82
  %v707 = vunpack.c.l.b16 %v83
  %v708 = vunpack.c.h.b16 %v83
  %v709 = vunpack.c.l.b16 %v84
  %v710 = vunpack.c.h.b16 %v84
  %v711 = vpack.c.b16 %v599, %v583
  %v712 = vpack.c.b16 %v600, %v584
  %v713 = vpack.c.b16 %v601, %v585
  %v714 = vpack.c.b16 %v602, %v586
  %v715 = vpack.c.b16 %v603, %v587
  %v716 = vpack.c.b16 %v604, %v588
  %v717 = vpack.c.b16 %v605, %v589
  %v718 = vpack.c.b16 %v606, %v590
  %v719 = vpack.c.b16 %v607, %v591
  %v720 = vpack.c.b16 %v608, %v592
  %v721 = vpack.c.b16 %v609, %v593
  %v722 = vpack.c.b16 %v610, %v594
  %v723 = vpack.c.b16 %v611, %v595
  %v724 = vpack.c.b16 %v612, %v596
  %v725 = vpack.c.b16 %v613, %v597
  %v726 = vpack.c.b16 %v614, %v598
  %v727 = vpack.c.b16 %v631, %v615
  %v728 = vpack.c.b16 %v632, %v616
  %v729 = vpack.c.b16 %v633, %v617
  %v730 = vpack.c.b16 %v634, %v618
  %v731 = vpack.c.b16 %v635, %v619
  %v732 = vpack.c.b16 %v636, %v620
  %v733 = vpack.c.b16 %v637, %v621
  %v734 = vpack.c.b16 %v638, %v622
  %v735 = vpack.c.b16 %v639, %v623
  %v736 = vpack.c.b16 %v640, %v624
  %v737 = vpack.c.b16 %v641, %v625
  %v738 = vpack.c.b16 %v642, %v626
  %v739 = vpack.c.b16 %v643, %v627
  %v740 = vpack.c.b16 %v644, %v628
  %v741 = vpack.c.b16 %v645, %v629
  %v742 = vpack.c.b16 %v646, %v630
  %v743 = vpack.c.b16 %v663, %v647
  %v744 = vpack.c.b16 %v664, %v648
  %v745 = vpack.c.b16 %v665, %v649
  %v746 = vpack.c.b16 %v666, %v650
  %v747 = vpack.c.b16 %v667, %v651
  %v748 = vpack.c.b16 %v668, %v652
  %v749 = vpack.c.b16 %v669, %v653
  %v750 = vpack.c.b16 %v670, %v654
  %v751 = vpack.c.b16 %v671, %v655
  %v752 = vpack.c.b16 %v672, %v656
  %v753 = vpack.c.b16 %v673, %v657
  %v754 = vpack.c.b16 %v674, %v658
  %v755 = vpack.c.b16 %v675, %v659
  %v756 = vpack.c.b16 %v676, %v660
  %v757 = vpack.c.b16 %v677, %v661
  %v758 = vpack.c.b16 %v678, %v662
  %v759 = vpack.c.b16 %v695, %v679
  %v760 = vpack.c.b16 %v696, %v680
  %v761 = vpack.c.b16 %v697, %v681
  %v762 = vpack.c.b16 %v698, %v682
  %v763 = vpack.c.b16 %v699, %v683
  %v764 = vpack.c.b16 %v700, %v684
  %v765 = vpack.c.b16 %v701, %v685
  %v766 = vpack.c.b16 %v702, %v686
  %v767 = vpack.c.b16 %v703, %v687
  %v768 = vpack.c.b16 %v704, %v688
  %v769 = vpack.c.b16 %v705, %v689
  %v770 = vpack.c.b16 %v706, %v690
  %v771 = vpack.c.b16 %v707, %v691
  %v772 = vpack.c.b16 %v708, %v692
  %v773 = vpack.c.b16 %v709, %v693
  %v774 = vpack.c.b16 %v710, %v694
  %839 = vmatprep.subr.bf16.mxu0 0
  %840 = vmatpush1.bf16.msra.mxu0 %v358
  %841 = vmatprep.subr.bf16.mxu0 0
  %842 = vmatpush1.bf16.msra.mxu0 %v357
  %843 = vmatprep.subr.bf16.mxu0 0
  %844 = vmatpush1.bf16.msra.mxu0 %v356
  %845 = vmatprep.subr.bf16.mxu0 0
  %846 = vmatpush1.bf16.msra.mxu0 %v355
  %847 = vmatprep.subr.bf16.mxu0 0
  %848 = vmatpush1.bf16.msra.mxu0 %v354
  %849 = vmatprep.subr.bf16.mxu0 0
  %850 = vmatpush1.bf16.msra.mxu0 %v353
  %851 = vmatprep.subr.bf16.mxu0 0
  %852 = vmatpush1.bf16.msra.mxu0 %v352
  %853 = vmatprep.subr.bf16.mxu0 0
  %854 = vmatpush1.bf16.msra.mxu0 %v351
  %855 = vmatprep.subr.bf16.mxu0 0
  %856 = vmatpush2.bf16.msra.mxu0 %v366
  %857 = vmatprep.subr.bf16.mxu0 0
  %858 = vmatpush2.bf16.msra.mxu0 %v365
  %859 = vmatprep.subr.bf16.mxu0 0
  %860 = vmatpush2.bf16.msra.mxu0 %v364
  %861 = vmatprep.subr.bf16.mxu0 0
  %862 = vmatpush2.bf16.msra.mxu0 %v363
  %863 = vmatprep.subr.bf16.mxu0 0
  %864 = vmatpush2.bf16.msra.mxu0 %v362
  %865 = vmatprep.subr.bf16.mxu0 0
  %866 = vmatpush2.bf16.msra.mxu0 %v361
  %867 = vmatprep.subr.bf16.mxu0 0
  %868 = vmatpush2.bf16.msra.mxu0 %v360
  %869 = vmatprep.subr.bf16.mxu0 0
  %870 = vmatpush2.bf16.msra.mxu0 %v359
  %871 = vmatprep.mubr.bf16.mxu0 %v712
  %872 = vmatmul.mubr.bf16.gmra.mxu0 %v711
  %v873 = vpop.f32.mrf.mxu0
  %v874 = vadd.f32 %v482, %v873
  %v875 = vpop.f32.mrf.mxu0
  %v876 = vpop.f32.mrf.mxu0
  %v877 = vadd.f32 %v487, %v876
  %v878 = vpop.f32.mrf.mxu0
  %879 = vmatprep.mubr.bf16.mxu0 %v728
  %880 = vmatmul.mubr.bf16.gmra.mxu0 %v727
  %v881 = vpop.f32.mrf.mxu0
  %v882 = vadd.f32 %v492, %v881
  %v883 = vpop.f32.mrf.mxu0
  %v884 = vpop.f32.mrf.mxu0
  %v885 = vadd.f32 %v497, %v884
  %v886 = vpop.f32.mrf.mxu0
  %887 = vmatprep.mubr.bf16.mxu0 %v744
  %888 = vmatmul.mubr.bf16.gmra.mxu0 %v743
  %v889 = vpop.f32.mrf.mxu0
  %v890 = vadd.f32 %v502, %v889
  %v891 = vpop.f32.mrf.mxu0
  %v892 = vpop.f32.mrf.mxu0
  %v893 = vadd.f32 %v507, %v892
  %v894 = vpop.f32.mrf.mxu0
  %895 = vmatprep.mubr.bf16.mxu0 %v760
  %896 = vmatmul.mubr.bf16.gmra.mxu0 %v759
  %v897 = vpop.f32.mrf.mxu0
  %v898 = vadd.f32 %v512, %v897
  %v899 = vpop.f32.mrf.mxu0
  %v900 = vpop.f32.mrf.mxu0
  %v901 = vadd.f32 %v517, %v900
  %v902 = vpop.f32.mrf.mxu0
  %903 = vdwg.mxu0
  %904 = vmatprep.subr.bf16.mxu0 0
  %905 = vmatpush1.bf16.msra.mxu0 %v374
  %906 = vmatprep.subr.bf16.mxu0 0
  %907 = vmatpush1.bf16.msra.mxu0 %v373
  %908 = vmatprep.subr.bf16.mxu0 0
  %909 = vmatpush1.bf16.msra.mxu0 %v372
  %910 = vmatprep.subr.bf16.mxu0 0
  %911 = vmatpush1.bf16.msra.mxu0 %v371
  %912 = vmatprep.subr.bf16.mxu0 0
  %913 = vmatpush1.bf16.msra.mxu0 %v370
  %914 = vmatprep.subr.bf16.mxu0 0
  %915 = vmatpush1.bf16.msra.mxu0 %v369
  %916 = vmatprep.subr.bf16.mxu0 0
  %917 = vmatpush1.bf16.msra.mxu0 %v368
  %918 = vmatprep.subr.bf16.mxu0 0
  %919 = vmatpush1.bf16.msra.mxu0 %v367
  %920 = vmatprep.subr.bf16.mxu0 0
  %921 = vmatpush2.bf16.msra.mxu0 %v382
  %922 = vmatprep.subr.bf16.mxu0 0
  %923 = vmatpush2.bf16.msra.mxu0 %v381
  %924 = vmatprep.subr.bf16.mxu0 0
  %925 = vmatpush2.bf16.msra.mxu0 %v380
  %926 = vmatprep.subr.bf16.mxu0 0
  %927 = vmatpush2.bf16.msra.mxu0 %v379
  %928 = vmatprep.subr.bf16.mxu0 0
  %929 = vmatpush2.bf16.msra.mxu0 %v378
  %930 = vmatprep.subr.bf16.mxu0 0
  %931 = vmatpush2.bf16.msra.mxu0 %v377
  %932 = vmatprep.subr.bf16.mxu0 0
  %933 = vmatpush2.bf16.msra.mxu0 %v376
  %934 = vmatprep.subr.bf16.mxu0 0
  %935 = vmatpush2.bf16.msra.mxu0 %v375
  %936 = vmatprep.mubr.bf16.mxu0 %v714
  %937 = vmatmul.mubr.bf16.gmra.mxu0 %v713
  %v938 = vpop.f32.mrf.mxu0
  %v939 = vadd.f32 %v874, %v938
  %v940 = vpop.f32.mrf.mxu0
  %v941 = vpop.f32.mrf.mxu0
  %v942 = vadd.f32 %v877, %v941
  %v943 = vpop.f32.mrf.mxu0
  %944 = vmatprep.mubr.bf16.mxu0 %v730
  %945 = vmatmul.mubr.bf16.gmra.mxu0 %v729
  %v946 = vpop.f32.mrf.mxu0
  %v947 = vadd.f32 %v882, %v946
  %v948 = vpop.f32.mrf.mxu0
  %v949 = vpop.f32.mrf.mxu0
  %v950 = vadd.f32 %v885, %v949
  %v951 = vpop.f32.mrf.mxu0
  %952 = vmatprep.mubr.bf16.mxu0 %v746
  %953 = vmatmul.mubr.bf16.gmra.mxu0 %v745
  %v954 = vpop.f32.mrf.mxu0
  %v955 = vadd.f32 %v890, %v954
  %v956 = vpop.f32.mrf.mxu0
  %v957 = vpop.f32.mrf.mxu0
  %v958 = vadd.f32 %v893, %v957
  %v959 = vpop.f32.mrf.mxu0
  %960 = vmatprep.mubr.bf16.mxu0 %v762
  %961 = vmatmul.mubr.bf16.gmra.mxu0 %v761
  %v962 = vpop.f32.mrf.mxu0
  %v963 = vadd.f32 %v898, %v962
  %v964 = vpop.f32.mrf.mxu0
  %v965 = vpop.f32.mrf.mxu0
  %v966 = vadd.f32 %v901, %v965
  %v967 = vpop.f32.mrf.mxu0
  %968 = vdwg.mxu0
  %969 = vmatprep.subr.bf16.mxu0 0
  %970 = vmatpush1.bf16.msra.mxu0 %v390
  %971 = vmatprep.subr.bf16.mxu0 0
  %972 = vmatpush1.bf16.msra.mxu0 %v389
  %973 = vmatprep.subr.bf16.mxu0 0
  %974 = vmatpush1.bf16.msra.mxu0 %v388
  %975 = vmatprep.subr.bf16.mxu0 0
  %976 = vmatpush1.bf16.msra.mxu0 %v387
  %977 = vmatprep.subr.bf16.mxu0 0
  %978 = vmatpush1.bf16.msra.mxu0 %v386
  %979 = vmatprep.subr.bf16.mxu0 0
  %980 = vmatpush1.bf16.msra.mxu0 %v385
  %981 = vmatprep.subr.bf16.mxu0 0
  %982 = vmatpush1.bf16.msra.mxu0 %v384
  %983 = vmatprep.subr.bf16.mxu0 0
  %984 = vmatpush1.bf16.msra.mxu0 %v383
  %985 = vmatprep.subr.bf16.mxu0 0
  %986 = vmatpush2.bf16.msra.mxu0 %v398
  %987 = vmatprep.subr.bf16.mxu0 0
  %988 = vmatpush2.bf16.msra.mxu0 %v397
  %989 = vmatprep.subr.bf16.mxu0 0
  %990 = vmatpush2.bf16.msra.mxu0 %v396
  %991 = vmatprep.subr.bf16.mxu0 0
  %992 = vmatpush2.bf16.msra.mxu0 %v395
  %993 = vmatprep.subr.bf16.mxu0 0
  %994 = vmatpush2.bf16.msra.mxu0 %v394
  %995 = vmatprep.subr.bf16.mxu0 0
  %996 = vmatpush2.bf16.msra.mxu0 %v393
  %997 = vmatprep.subr.bf16.mxu0 0
  %998 = vmatpush2.bf16.msra.mxu0 %v392
  %999 = vmatprep.subr.bf16.mxu0 0
  %1000 = vmatpush2.bf16.msra.mxu0 %v391
  %1001 = vmatprep.mubr.bf16.mxu0 %v716
  %1002 = vmatmul.mubr.bf16.gmra.mxu0 %v715
  %v1003 = vpop.f32.mrf.mxu0
  %v1004 = vadd.f32 %v939, %v1003
  %v1005 = vpop.f32.mrf.mxu0
  %v1006 = vpop.f32.mrf.mxu0
  %v1007 = vadd.f32 %v942, %v1006
  %v1008 = vpop.f32.mrf.mxu0
  %1009 = vmatprep.mubr.bf16.mxu0 %v732
  %1010 = vmatmul.mubr.bf16.gmra.mxu0 %v731
  %v1011 = vpop.f32.mrf.mxu0
  %v1012 = vadd.f32 %v947, %v1011
  %v1013 = vpop.f32.mrf.mxu0
  %v1014 = vpop.f32.mrf.mxu0
  %v1015 = vadd.f32 %v950, %v1014
  %v1016 = vpop.f32.mrf.mxu0
  %1017 = vmatprep.mubr.bf16.mxu0 %v748
  %1018 = vmatmul.mubr.bf16.gmra.mxu0 %v747
  %v1019 = vpop.f32.mrf.mxu0
  %v1020 = vadd.f32 %v955, %v1019
  %v1021 = vpop.f32.mrf.mxu0
  %v1022 = vpop.f32.mrf.mxu0
  %v1023 = vadd.f32 %v958, %v1022
  %v1024 = vpop.f32.mrf.mxu0
  %1025 = vmatprep.mubr.bf16.mxu0 %v764
  %1026 = vmatmul.mubr.bf16.gmra.mxu0 %v763
  %v1027 = vpop.f32.mrf.mxu0
  %v1028 = vadd.f32 %v963, %v1027
  %v1029 = vpop.f32.mrf.mxu0
  %v1030 = vpop.f32.mrf.mxu0
  %v1031 = vadd.f32 %v966, %v1030
  %v1032 = vpop.f32.mrf.mxu0
  %1033 = vdwg.mxu0
  %1034 = vmatprep.subr.bf16.mxu0 0
  %1035 = vmatpush1.bf16.msra.mxu0 %v406
  %1036 = vmatprep.subr.bf16.mxu0 0
  %1037 = vmatpush1.bf16.msra.mxu0 %v405
  %1038 = vmatprep.subr.bf16.mxu0 0
  %1039 = vmatpush1.bf16.msra.mxu0 %v404
  %1040 = vmatprep.subr.bf16.mxu0 0
  %1041 = vmatpush1.bf16.msra.mxu0 %v403
  %1042 = vmatprep.subr.bf16.mxu0 0
  %1043 = vmatpush1.bf16.msra.mxu0 %v402
  %1044 = vmatprep.subr.bf16.mxu0 0
  %1045 = vmatpush1.bf16.msra.mxu0 %v401
  %1046 = vmatprep.subr.bf16.mxu0 0
  %1047 = vmatpush1.bf16.msra.mxu0 %v400
  %1048 = vmatprep.subr.bf16.mxu0 0
  %1049 = vmatpush1.bf16.msra.mxu0 %v399
  %1050 = vmatprep.subr.bf16.mxu0 0
  %1051 = vmatpush2.bf16.msra.mxu0 %v414
  %1052 = vmatprep.subr.bf16.mxu0 0
  %1053 = vmatpush2.bf16.msra.mxu0 %v413
  %1054 = vmatprep.subr.bf16.mxu0 0
  %1055 = vmatpush2.bf16.msra.mxu0 %v412
  %1056 = vmatprep.subr.bf16.mxu0 0
  %1057 = vmatpush2.bf16.msra.mxu0 %v411
  %1058 = vmatprep.subr.bf16.mxu0 0
  %1059 = vmatpush2.bf16.msra.mxu0 %v410
  %1060 = vmatprep.subr.bf16.mxu0 0
  %1061 = vmatpush2.bf16.msra.mxu0 %v409
  %1062 = vmatprep.subr.bf16.mxu0 0
  %1063 = vmatpush2.bf16.msra.mxu0 %v408
  %1064 = vmatprep.subr.bf16.mxu0 0
  %1065 = vmatpush2.bf16.msra.mxu0 %v407
  %1066 = vmatprep.mubr.bf16.mxu0 %v718
  %1067 = vmatmul.mubr.bf16.gmra.mxu0 %v717
  %v1068 = vpop.f32.mrf.mxu0
  %v1069 = vadd.f32 %v1004, %v1068
  %v1070 = vpop.f32.mrf.mxu0
  %v1071 = vpop.f32.mrf.mxu0
  %v1072 = vadd.f32 %v1007, %v1071
  %v1073 = vpop.f32.mrf.mxu0
  %1074 = vmatprep.mubr.bf16.mxu0 %v734
  %1075 = vmatmul.mubr.bf16.gmra.mxu0 %v733
  %v1076 = vpop.f32.mrf.mxu0
  %v1077 = vadd.f32 %v1012, %v1076
  %v1078 = vpop.f32.mrf.mxu0
  %v1079 = vpop.f32.mrf.mxu0
  %v1080 = vadd.f32 %v1015, %v1079
  %v1081 = vpop.f32.mrf.mxu0
  %1082 = vmatprep.mubr.bf16.mxu0 %v750
  %1083 = vmatmul.mubr.bf16.gmra.mxu0 %v749
  %v1084 = vpop.f32.mrf.mxu0
  %v1085 = vadd.f32 %v1020, %v1084
  %v1086 = vpop.f32.mrf.mxu0
  %v1087 = vpop.f32.mrf.mxu0
  %v1088 = vadd.f32 %v1023, %v1087
  %v1089 = vpop.f32.mrf.mxu0
  %1090 = vmatprep.mubr.bf16.mxu0 %v766
  %1091 = vmatmul.mubr.bf16.gmra.mxu0 %v765
  %v1092 = vpop.f32.mrf.mxu0
  %v1093 = vadd.f32 %v1028, %v1092
  %v1094 = vpop.f32.mrf.mxu0
  %v1095 = vpop.f32.mrf.mxu0
  %v1096 = vadd.f32 %v1031, %v1095
  %v1097 = vpop.f32.mrf.mxu0
  %1098 = vdwg.mxu0
  %1099 = vmatprep.subr.bf16.mxu0 0
  %1100 = vmatpush1.bf16.msra.mxu0 %v422
  %1101 = vmatprep.subr.bf16.mxu0 0
  %1102 = vmatpush1.bf16.msra.mxu0 %v421
  %1103 = vmatprep.subr.bf16.mxu0 0
  %1104 = vmatpush1.bf16.msra.mxu0 %v420
  %1105 = vmatprep.subr.bf16.mxu0 0
  %1106 = vmatpush1.bf16.msra.mxu0 %v419
  %1107 = vmatprep.subr.bf16.mxu0 0
  %1108 = vmatpush1.bf16.msra.mxu0 %v418
  %1109 = vmatprep.subr.bf16.mxu0 0
  %1110 = vmatpush1.bf16.msra.mxu0 %v417
  %1111 = vmatprep.subr.bf16.mxu0 0
  %1112 = vmatpush1.bf16.msra.mxu0 %v416
  %1113 = vmatprep.subr.bf16.mxu0 0
  %1114 = vmatpush1.bf16.msra.mxu0 %v415
  %1115 = vmatprep.subr.bf16.mxu0 0
  %1116 = vmatpush2.bf16.msra.mxu0 %v430
  %1117 = vmatprep.subr.bf16.mxu0 0
  %1118 = vmatpush2.bf16.msra.mxu0 %v429
  %1119 = vmatprep.subr.bf16.mxu0 0
  %1120 = vmatpush2.bf16.msra.mxu0 %v428
  %1121 = vmatprep.subr.bf16.mxu0 0
  %1122 = vmatpush2.bf16.msra.mxu0 %v427
  %1123 = vmatprep.subr.bf16.mxu0 0
  %1124 = vmatpush2.bf16.msra.mxu0 %v426
  %1125 = vmatprep.subr.bf16.mxu0 0
  %1126 = vmatpush2.bf16.msra.mxu0 %v425
  %1127 = vmatprep.subr.bf16.mxu0 0
  %1128 = vmatpush2.bf16.msra.mxu0 %v424
  %1129 = vmatprep.subr.bf16.mxu0 0
  %1130 = vmatpush2.bf16.msra.mxu0 %v423
  %1131 = vmatprep.mubr.bf16.mxu0 %v720
  %1132 = vmatmul.mubr.bf16.gmra.mxu0 %v719
  %v1133 = vpop.f32.mrf.mxu0
  %v1134 = vadd.f32 %v1069, %v1133
  %v1135 = vpop.f32.mrf.mxu0
  %v1136 = vpop.f32.mrf.mxu0
  %v1137 = vadd.f32 %v1072, %v1136
  %v1138 = vpop.f32.mrf.mxu0
  %1139 = vmatprep.mubr.bf16.mxu0 %v736
  %1140 = vmatmul.mubr.bf16.gmra.mxu0 %v735
  %v1141 = vpop.f32.mrf.mxu0
  %v1142 = vadd.f32 %v1077, %v1141
  %v1143 = vpop.f32.mrf.mxu0
  %v1144 = vpop.f32.mrf.mxu0
  %v1145 = vadd.f32 %v1080, %v1144
  %v1146 = vpop.f32.mrf.mxu0
  %1147 = vmatprep.mubr.bf16.mxu0 %v752
  %1148 = vmatmul.mubr.bf16.gmra.mxu0 %v751
  %v1149 = vpop.f32.mrf.mxu0
  %v1150 = vadd.f32 %v1085, %v1149
  %v1151 = vpop.f32.mrf.mxu0
  %v1152 = vpop.f32.mrf.mxu0
  %v1153 = vadd.f32 %v1088, %v1152
  %v1154 = vpop.f32.mrf.mxu0
  %1155 = vmatprep.mubr.bf16.mxu0 %v768
  %1156 = vmatmul.mubr.bf16.gmra.mxu0 %v767
  %v1157 = vpop.f32.mrf.mxu0
  %v1158 = vadd.f32 %v1093, %v1157
  %v1159 = vpop.f32.mrf.mxu0
  %v1160 = vpop.f32.mrf.mxu0
  %v1161 = vadd.f32 %v1096, %v1160
  %v1162 = vpop.f32.mrf.mxu0
  %1163 = vdwg.mxu0
  %1164 = vmatprep.subr.bf16.mxu0 0
  %1165 = vmatpush1.bf16.msra.mxu0 %v438
  %1166 = vmatprep.subr.bf16.mxu0 0
  %1167 = vmatpush1.bf16.msra.mxu0 %v437
  %1168 = vmatprep.subr.bf16.mxu0 0
  %1169 = vmatpush1.bf16.msra.mxu0 %v436
  %1170 = vmatprep.subr.bf16.mxu0 0
  %1171 = vmatpush1.bf16.msra.mxu0 %v435
  %1172 = vmatprep.subr.bf16.mxu0 0
  %1173 = vmatpush1.bf16.msra.mxu0 %v434
  %1174 = vmatprep.subr.bf16.mxu0 0
  %1175 = vmatpush1.bf16.msra.mxu0 %v433
  %1176 = vmatprep.subr.bf16.mxu0 0
  %1177 = vmatpush1.bf16.msra.mxu0 %v432
  %1178 = vmatprep.subr.bf16.mxu0 0
  %1179 = vmatpush1.bf16.msra.mxu0 %v431
  %1180 = vmatprep.subr.bf16.mxu0 0
  %1181 = vmatpush2.bf16.msra.mxu0 %v446
  %1182 = vmatprep.subr.bf16.mxu0 0
  %1183 = vmatpush2.bf16.msra.mxu0 %v445
  %1184 = vmatprep.subr.bf16.mxu0 0
  %1185 = vmatpush2.bf16.msra.mxu0 %v444
  %1186 = vmatprep.subr.bf16.mxu0 0
  %1187 = vmatpush2.bf16.msra.mxu0 %v443
  %1188 = vmatprep.subr.bf16.mxu0 0
  %1189 = vmatpush2.bf16.msra.mxu0 %v442
  %1190 = vmatprep.subr.bf16.mxu0 0
  %1191 = vmatpush2.bf16.msra.mxu0 %v441
  %1192 = vmatprep.subr.bf16.mxu0 0
  %1193 = vmatpush2.bf16.msra.mxu0 %v440
  %1194 = vmatprep.subr.bf16.mxu0 0
  %1195 = vmatpush2.bf16.msra.mxu0 %v439
  %1196 = vmatprep.mubr.bf16.mxu0 %v722
  %1197 = vmatmul.mubr.bf16.gmra.mxu0 %v721
  %v1198 = vpop.f32.mrf.mxu0
  %v1199 = vadd.f32 %v1134, %v1198
  %v1200 = vpop.f32.mrf.mxu0
  %v1201 = vpop.f32.mrf.mxu0
  %v1202 = vadd.f32 %v1137, %v1201
  %v1203 = vpop.f32.mrf.mxu0
  %1204 = vmatprep.mubr.bf16.mxu0 %v738
  %1205 = vmatmul.mubr.bf16.gmra.mxu0 %v737
  %v1206 = vpop.f32.mrf.mxu0
  %v1207 = vadd.f32 %v1142, %v1206
  %v1208 = vpop.f32.mrf.mxu0
  %v1209 = vpop.f32.mrf.mxu0
  %v1210 = vadd.f32 %v1145, %v1209
  %v1211 = vpop.f32.mrf.mxu0
  %1212 = vmatprep.mubr.bf16.mxu0 %v754
  %1213 = vmatmul.mubr.bf16.gmra.mxu0 %v753
  %v1214 = vpop.f32.mrf.mxu0
  %v1215 = vadd.f32 %v1150, %v1214
  %v1216 = vpop.f32.mrf.mxu0
  %v1217 = vpop.f32.mrf.mxu0
  %v1218 = vadd.f32 %v1153, %v1217
  %v1219 = vpop.f32.mrf.mxu0
  %1220 = vmatprep.mubr.bf16.mxu0 %v770
  %1221 = vmatmul.mubr.bf16.gmra.mxu0 %v769
  %v1222 = vpop.f32.mrf.mxu0
  %v1223 = vadd.f32 %v1158, %v1222
  %v1224 = vpop.f32.mrf.mxu0
  %v1225 = vpop.f32.mrf.mxu0
  %v1226 = vadd.f32 %v1161, %v1225
  %v1227 = vpop.f32.mrf.mxu0
  %1228 = vdwg.mxu0
  %1229 = vmatprep.subr.bf16.mxu0 0
  %1230 = vmatpush1.bf16.msra.mxu0 %v454
  %1231 = vmatprep.subr.bf16.mxu0 0
  %1232 = vmatpush1.bf16.msra.mxu0 %v453
  %1233 = vmatprep.subr.bf16.mxu0 0
  %1234 = vmatpush1.bf16.msra.mxu0 %v452
  %1235 = vmatprep.subr.bf16.mxu0 0
  %1236 = vmatpush1.bf16.msra.mxu0 %v451
  %1237 = vmatprep.subr.bf16.mxu0 0
  %1238 = vmatpush1.bf16.msra.mxu0 %v450
  %1239 = vmatprep.subr.bf16.mxu0 0
  %1240 = vmatpush1.bf16.msra.mxu0 %v449
  %1241 = vmatprep.subr.bf16.mxu0 0
  %1242 = vmatpush1.bf16.msra.mxu0 %v448
  %1243 = vmatprep.subr.bf16.mxu0 0
  %1244 = vmatpush1.bf16.msra.mxu0 %v447
  %1245 = vmatprep.subr.bf16.mxu0 0
  %1246 = vmatpush2.bf16.msra.mxu0 %v462
  %1247 = vmatprep.subr.bf16.mxu0 0
  %1248 = vmatpush2.bf16.msra.mxu0 %v461
  %1249 = vmatprep.subr.bf16.mxu0 0
  %1250 = vmatpush2.bf16.msra.mxu0 %v460
  %1251 = vmatprep.subr.bf16.mxu0 0
  %1252 = vmatpush2.bf16.msra.mxu0 %v459
  %1253 = vmatprep.subr.bf16.mxu0 0
  %1254 = vmatpush2.bf16.msra.mxu0 %v458
  %1255 = vmatprep.subr.bf16.mxu0 0
  %1256 = vmatpush2.bf16.msra.mxu0 %v457
  %1257 = vmatprep.subr.bf16.mxu0 0
  %1258 = vmatpush2.bf16.msra.mxu0 %v456
  %1259 = vmatprep.subr.bf16.mxu0 0
  %1260 = vmatpush2.bf16.msra.mxu0 %v455
  %1261 = vmatprep.mubr.bf16.mxu0 %v724
  %1262 = vmatmul.mubr.bf16.gmra.mxu0 %v723
  %v1263 = vpop.f32.mrf.mxu0
  %v1264 = vadd.f32 %v1199, %v1263
  %v1265 = vpop.f32.mrf.mxu0
  %v1266 = vpop.f32.mrf.mxu0
  %v1267 = vadd.f32 %v1202, %v1266
  %v1268 = vpop.f32.mrf.mxu0
  %1269 = vmatprep.mubr.bf16.mxu0 %v740
  %1270 = vmatmul.mubr.bf16.gmra.mxu0 %v739
  %v1271 = vpop.f32.mrf.mxu0
  %v1272 = vadd.f32 %v1207, %v1271
  %v1273 = vpop.f32.mrf.mxu0
  %v1274 = vpop.f32.mrf.mxu0
  %v1275 = vadd.f32 %v1210, %v1274
  %v1276 = vpop.f32.mrf.mxu0
  %1277 = vmatprep.mubr.bf16.mxu0 %v756
  %1278 = vmatmul.mubr.bf16.gmra.mxu0 %v755
  %v1279 = vpop.f32.mrf.mxu0
  %v1280 = vadd.f32 %v1215, %v1279
  %v1281 = vpop.f32.mrf.mxu0
  %v1282 = vpop.f32.mrf.mxu0
  %v1283 = vadd.f32 %v1218, %v1282
  %v1284 = vpop.f32.mrf.mxu0
  %1285 = vmatprep.mubr.bf16.mxu0 %v772
  %1286 = vmatmul.mubr.bf16.gmra.mxu0 %v771
  %v1287 = vpop.f32.mrf.mxu0
  %v1288 = vadd.f32 %v1223, %v1287
  %v1289 = vpop.f32.mrf.mxu0
  %v1290 = vpop.f32.mrf.mxu0
  %v1291 = vadd.f32 %v1226, %v1290
  %v1292 = vpop.f32.mrf.mxu0
  %1293 = vdwg.mxu0
  %1294 = vmatprep.subr.bf16.mxu0 0
  %1295 = vmatpush1.bf16.msra.mxu0 %v470
  %1296 = vmatprep.subr.bf16.mxu0 0
  %1297 = vmatpush1.bf16.msra.mxu0 %v469
  %1298 = vmatprep.subr.bf16.mxu0 0
  %1299 = vmatpush1.bf16.msra.mxu0 %v468
  %1300 = vmatprep.subr.bf16.mxu0 0
  %1301 = vmatpush1.bf16.msra.mxu0 %v467
  %1302 = vmatprep.subr.bf16.mxu0 0
  %1303 = vmatpush1.bf16.msra.mxu0 %v466
  %1304 = vmatprep.subr.bf16.mxu0 0
  %1305 = vmatpush1.bf16.msra.mxu0 %v465
  %1306 = vmatprep.subr.bf16.mxu0 0
  %1307 = vmatpush1.bf16.msra.mxu0 %v464
  %1308 = vmatprep.subr.bf16.mxu0 0
  %1309 = vmatpush1.bf16.msra.mxu0 %v463
  %1310 = vmatprep.subr.bf16.mxu0 0
  %1311 = vmatpush2.bf16.msra.mxu0 %v478
  %1312 = vmatprep.subr.bf16.mxu0 0
  %1313 = vmatpush2.bf16.msra.mxu0 %v477
  %1314 = vmatprep.subr.bf16.mxu0 0
  %1315 = vmatpush2.bf16.msra.mxu0 %v476
  %1316 = vmatprep.subr.bf16.mxu0 0
  %1317 = vmatpush2.bf16.msra.mxu0 %v475
  %1318 = vmatprep.subr.bf16.mxu0 0
  %1319 = vmatpush2.bf16.msra.mxu0 %v474
  %1320 = vmatprep.subr.bf16.mxu0 0
  %1321 = vmatpush2.bf16.msra.mxu0 %v473
  %1322 = vmatprep.subr.bf16.mxu0 0
  %1323 = vmatpush2.bf16.msra.mxu0 %v472
  %1324 = vmatprep.subr.bf16.mxu0 0
  %1325 = vmatpush2.bf16.msra.mxu0 %v471
  %1326 = vmatprep.mubr.bf16.mxu0 %v726
  %1327 = vmatmul.mubr.bf16.gmra.mxu0 %v725
  %v1328 = vpop.f32.mrf.mxu0
  %v1329 = vadd.f32 %v1264, %v1328
  %v1330 = vpop.f32.mrf.mxu0
  %v1331 = vpop.f32.mrf.mxu0
  %v1332 = vadd.f32 %v1267, %v1331
  %v1333 = vpop.f32.mrf.mxu0
  %1334 = vmatprep.mubr.bf16.mxu0 %v742
  %1335 = vmatmul.mubr.bf16.gmra.mxu0 %v741
  %v1336 = vpop.f32.mrf.mxu0
  %v1337 = vadd.f32 %v1272, %v1336
  %v1338 = vpop.f32.mrf.mxu0
  %v1339 = vpop.f32.mrf.mxu0
  %v1340 = vadd.f32 %v1275, %v1339
  %v1341 = vpop.f32.mrf.mxu0
  %1342 = vmatprep.mubr.bf16.mxu0 %v758
  %1343 = vmatmul.mubr.bf16.gmra.mxu0 %v757
  %v1344 = vpop.f32.mrf.mxu0
  %v1345 = vadd.f32 %v1280, %v1344
  %v1346 = vpop.f32.mrf.mxu0
  %v1347 = vpop.f32.mrf.mxu0
  %v1348 = vadd.f32 %v1283, %v1347
  %v1349 = vpop.f32.mrf.mxu0
  %1350 = vmatprep.mubr.bf16.mxu0 %v774
  %1351 = vmatmul.mubr.bf16.gmra.mxu0 %v773
  %v1352 = vpop.f32.mrf.mxu0
  %v1353 = vadd.f32 %v1288, %v1352
  %v1354 = vpop.f32.mrf.mxu0
  %v1355 = vpop.f32.mrf.mxu0
  %v1356 = vadd.f32 %v1291, %v1355
  %v1357 = vpop.f32.mrf.mxu0
  %1358 = vdwg.mxu0
  %v1359 = vmax.f32 %v1329, 0.0
  %v1360 = vmax.f32 %v1332, 0.0
  %v1361 = vmax.f32 %v1337, 0.0
  %v1362 = vmax.f32 %v1340, 0.0
  %v1363 = vmax.f32 %v1345, 0.0
  %v1364 = vmax.f32 %v1348, 0.0
  %v1365 = vmax.f32 %v1353, 0.0
  %v1366 = vmax.f32 %v1356, 0.0
  %v1367 = vpack.c.bf16 %v1360, %v1359
  %v1368 = vpack.c.bf16 %v1362, %v1361
  %v1369 = vpack.c.bf16 %v1364, %v1363
  %v1370 = vpack.c.bf16 %v1366, %v1365
  %1372 = vset.pattern.permute.xlu0 0
  %1373 = vperm.xlu0 %1372, %v94
  %v1374 = vpop.permute.xlu0 %1373
  %vm1376 = vcmask 523264
  %v1378 = vsel %vm1376, %v85, 0
  %1380 = vmatprep.subr.bf16.mxu0 0
  %1381 = vmatpush1.bf16.msra.mxu0 0
  %1382 = vmatprep.subr.bf16.mxu0 0
  %1383 = vmatpush1.bf16.msra.mxu0 0
  %1384 = vmatprep.subr.bf16.mxu0 0
  %1385 = vmatpush1.bf16.msra.mxu0 0
  %1386 = vmatprep.subr.bf16.mxu0 0
  %1387 = vmatpush1.bf16.msra.mxu0 0
  %1388 = vmatprep.subr.bf16.mxu0 0
  %1389 = vmatpush1.bf16.msra.mxu0 %v1370
  %1390 = vmatprep.subr.bf16.mxu0 0
  %1391 = vmatpush1.bf16.msra.mxu0 %v1369
  %1392 = vmatprep.subr.bf16.mxu0 0
  %1393 = vmatpush1.bf16.msra.mxu0 %v1368
  %1394 = vmatprep.subr.bf16.mxu0 0
  %1395 = vmatpush1.bf16.msra.mxu0 %v1367
  %1396 = vmatprep.subr.bf16.mxu0 0
  %1397 = vmatpush2.bf16.msra.mxu0 0
  %1398 = vmatprep.subr.bf16.mxu0 0
  %1399 = vmatpush2.bf16.msra.mxu0 0
  %1400 = vmatprep.subr.bf16.mxu0 0
  %1401 = vmatpush2.bf16.msra.mxu0 0
  %1402 = vmatprep.subr.bf16.mxu0 0
  %1403 = vmatpush2.bf16.msra.mxu0 0
  %1404 = vmatprep.subr.bf16.mxu0 0
  %1405 = vmatpush2.bf16.msra.mxu0 0
  %1406 = vmatprep.subr.bf16.mxu0 0
  %1407 = vmatpush2.bf16.msra.mxu0 0
  %1408 = vmatprep.subr.bf16.mxu0 0
  %1409 = vmatpush2.bf16.msra.mxu0 0
  %1410 = vmatprep.subr.bf16.mxu0 0
  %1411 = vmatpush2.bf16.msra.mxu0 0
  %1412 = vmatprep.mubr.bf16.mxu0 0
  %1413 = vmatmul.mubr.bf16.gmra.mxu0 %v1378
  %v1414 = vpop.f32.mrf.mxu0
  %v1415 = vadd.f32 %v1374, %v1414
  %v1416 = vpop.f32.mrf.mxu0
  %v1417 = vpop.f32.mrf.mxu0
  %v1418 = vpop.f32.mrf.mxu0
  %1419 = vdwg.mxu0
  %vm1420 = vcmask 518144
  %v1421 = vsel %vm1420, %v1415, -inf
  %1422 = vmax.xlane.f32.xlu0 %v1421
  %v1423 = vpop.xlane.xlu0 %1422
  %v1424 = vsub.f32 %v1415, %v1423
  %v1425 = vmul.f32 %v1424, 1.442695
  %v1426 = vpow.pop %v1425
  %v1427 = vsel %vm1420, %v1426, 0.0
  %1428 = vadd.xlane.f32.xlu0 %v1427
  %v1429 = vpop.xlane.xlu0 %1428
  %v1430 = vrcp.pop %v1429
  %v1431 = vmul.f32 %v1426, %v1430
  %1432 = vst.msk [vmem:[%s5] sm:$0x7] %vm1420, %v1431
  %s1433 = scalar_lea.vmem %s0, 2048
  %v1434 = vld [vmem:[%s1433] sm:$0xff]
  %v1435 = vld [vmem:[%s1433 + $0x8] sm:$0xff]
  %v1436 = vld [vmem:[%s1433 + $0x10] sm:$0xff]
  %v1437 = vld [vmem:[%s1433 + $0x18] sm:$0xff]
  %v1438 = vld [vmem:[%s1433 + $0x20] sm:$0xff]
  %v1439 = vld [vmem:[%s1433 + $0x28] sm:$0xff]
  %v1440 = vld [vmem:[%s1433 + $0x30] sm:$0xff]
  %v1441 = vld [vmem:[%s1433 + $0x38] sm:$0xff]
  %v1442 = vld [vmem:[%s1433 + $0x40] sm:$0xff]
  %v1443 = vld [vmem:[%s1433 + $0x48] sm:$0xff]
  %v1444 = vld [vmem:[%s1433 + $0x50] sm:$0xff]
  %v1445 = vld [vmem:[%s1433 + $0x58] sm:$0xff]
  %v1446 = vld [vmem:[%s1433 + $0x60] sm:$0xff]
  %v1447 = vld [vmem:[%s1433 + $0x68] sm:$0xff]
  %v1448 = vld [vmem:[%s1433 + $0x70] sm:$0xff]
  %v1449 = vld [vmem:[%s1433 + $0x78] sm:$0xff]
  %v1450 = vld [vmem:[%s1433 + $0x80] sm:$0xff]
  %v1451 = vld [vmem:[%s1433 + $0x88] sm:$0xff]
  %v1452 = vld [vmem:[%s1433 + $0x90] sm:$0xff]
  %v1453 = vld [vmem:[%s1433 + $0x98] sm:$0xff]
  %v1454 = vld [vmem:[%s1433 + $0xa0] sm:$0xff]
  %v1455 = vld [vmem:[%s1433 + $0xa8] sm:$0xff]
  %v1456 = vld [vmem:[%s1433 + $0xb0] sm:$0xff]
  %v1457 = vld [vmem:[%s1433 + $0xb8] sm:$0xff]
  %v1458 = vld [vmem:[%s1433 + $0xc0] sm:$0xff]
  %v1459 = vld [vmem:[%s1433 + $0xc8] sm:$0xff]
  %v1460 = vld [vmem:[%s1433 + $0xd0] sm:$0xff]
  %v1461 = vld [vmem:[%s1433 + $0xd8] sm:$0xff]
  %v1462 = vld [vmem:[%s1433 + $0xe0] sm:$0xff]
  %v1463 = vld [vmem:[%s1433 + $0xe8] sm:$0xff]
  %v1464 = vld [vmem:[%s1433 + $0xf0] sm:$0xff]
  %v1465 = vld [vmem:[%s1433 + $0xf8] sm:$0xff]
  %v1466 = vld [vmem:[%s1433 + $0x100] sm:$0xff]
  %v1467 = vld [vmem:[%s1433 + $0x108] sm:$0xff]
  %v1468 = vld [vmem:[%s1433 + $0x110] sm:$0xff]
  %v1469 = vld [vmem:[%s1433 + $0x118] sm:$0xff]
  %v1470 = vld [vmem:[%s1433 + $0x120] sm:$0xff]
  %v1471 = vld [vmem:[%s1433 + $0x128] sm:$0xff]
  %v1472 = vld [vmem:[%s1433 + $0x130] sm:$0xff]
  %v1473 = vld [vmem:[%s1433 + $0x138] sm:$0xff]
  %v1474 = vld [vmem:[%s1433 + $0x140] sm:$0xff]
  %v1475 = vld [vmem:[%s1433 + $0x148] sm:$0xff]
  %v1476 = vld [vmem:[%s1433 + $0x150] sm:$0xff]
  %v1477 = vld [vmem:[%s1433 + $0x158] sm:$0xff]
  %v1478 = vld [vmem:[%s1433 + $0x160] sm:$0xff]
  %v1479 = vld [vmem:[%s1433 + $0x168] sm:$0xff]
  %v1480 = vld [vmem:[%s1433 + $0x170] sm:$0xff]
  %v1481 = vld [vmem:[%s1433 + $0x178] sm:$0xff]
  %v1482 = vld [vmem:[%s1433 + $0x180] sm:$0xff]
  %v1483 = vld [vmem:[%s1433 + $0x188] sm:$0xff]
  %v1484 = vld [vmem:[%s1433 + $0x190] sm:$0xff]
  %v1485 = vld [vmem:[%s1433 + $0x198] sm:$0xff]
  %v1486 = vld [vmem:[%s1433 + $0x1a0] sm:$0xff]
  %v1487 = vld [vmem:[%s1433 + $0x1a8] sm:$0xff]
  %v1488 = vld [vmem:[%s1433 + $0x1b0] sm:$0xff]
  %v1489 = vld [vmem:[%s1433 + $0x1b8] sm:$0xff]
  %v1490 = vld [vmem:[%s1433 + $0x1c0] sm:$0xff]
  %v1491 = vld [vmem:[%s1433 + $0x1c8] sm:$0xff]
  %v1492 = vld [vmem:[%s1433 + $0x1d0] sm:$0xff]
  %v1493 = vld [vmem:[%s1433 + $0x1d8] sm:$0xff]
  %v1494 = vld [vmem:[%s1433 + $0x1e0] sm:$0xff]
  %v1495 = vld [vmem:[%s1433 + $0x1e8] sm:$0xff]
  %v1496 = vld [vmem:[%s1433 + $0x1f0] sm:$0xff]
  %v1497 = vld [vmem:[%s1433 + $0x1f8] sm:$0xff]
  %v1498 = vld [vmem:[%s1433 + $0x200] sm:$0xff]
  %v1499 = vld [vmem:[%s1433 + $0x208] sm:$0xff]
  %v1500 = vld [vmem:[%s1433 + $0x210] sm:$0xff]
  %v1501 = vld [vmem:[%s1433 + $0x218] sm:$0xff]
  %v1502 = vld [vmem:[%s1433 + $0x220] sm:$0xff]
  %v1503 = vld [vmem:[%s1433 + $0x228] sm:$0xff]
  %v1504 = vld [vmem:[%s1433 + $0x230] sm:$0xff]
  %v1505 = vld [vmem:[%s1433 + $0x238] sm:$0xff]
  %v1506 = vld [vmem:[%s1433 + $0x240] sm:$0xff]
  %v1507 = vld [vmem:[%s1433 + $0x248] sm:$0xff]
  %v1508 = vld [vmem:[%s1433 + $0x250] sm:$0xff]
  %v1509 = vld [vmem:[%s1433 + $0x258] sm:$0xff]
  %v1510 = vld [vmem:[%s1433 + $0x260] sm:$0xff]
  %v1511 = vld [vmem:[%s1433 + $0x268] sm:$0xff]
  %v1512 = vld [vmem:[%s1433 + $0x270] sm:$0xff]
  %v1513 = vld [vmem:[%s1433 + $0x278] sm:$0xff]
  %v1514 = vld [vmem:[%s1433 + $0x280] sm:$0xff]
  %v1515 = vld [vmem:[%s1433 + $0x288] sm:$0xff]
  %v1516 = vld [vmem:[%s1433 + $0x290] sm:$0xff]
  %v1517 = vld [vmem:[%s1433 + $0x298] sm:$0xff]
  %v1518 = vld [vmem:[%s1433 + $0x2a0] sm:$0xff]
  %v1519 = vld [vmem:[%s1433 + $0x2a8] sm:$0xff]
  %v1520 = vld [vmem:[%s1433 + $0x2b0] sm:$0xff]
  %v1521 = vld [vmem:[%s1433 + $0x2b8] sm:$0xff]
  %v1522 = vld [vmem:[%s1433 + $0x2c0] sm:$0xff]
  %v1523 = vld [vmem:[%s1433 + $0x2c8] sm:$0xff]
  %v1524 = vld [vmem:[%s1433 + $0x2d0] sm:$0xff]
  %v1525 = vld [vmem:[%s1433 + $0x2d8] sm:$0xff]
  %v1526 = vld [vmem:[%s1433 + $0x2e0] sm:$0xff]
  %v1527 = vld [vmem:[%s1433 + $0x2e8] sm:$0xff]
  %v1528 = vld [vmem:[%s1433 + $0x2f0] sm:$0xff]
  %v1529 = vld [vmem:[%s1433 + $0x2f8] sm:$0xff]
  %v1530 = vld [vmem:[%s1433 + $0x300] sm:$0xff]
  %v1531 = vld [vmem:[%s1433 + $0x308] sm:$0xff]
  %v1532 = vld [vmem:[%s1433 + $0x310] sm:$0xff]
  %v1533 = vld [vmem:[%s1433 + $0x318] sm:$0xff]
  %v1534 = vld [vmem:[%s1433 + $0x320] sm:$0xff]
  %v1535 = vld [vmem:[%s1433 + $0x328] sm:$0xff]
  %v1536 = vld [vmem:[%s1433 + $0x330] sm:$0xff]
  %v1537 = vld [vmem:[%s1433 + $0x338] sm:$0xff]
  %v1538 = vld [vmem:[%s1433 + $0x340] sm:$0xff]
  %v1539 = vld [vmem:[%s1433 + $0x348] sm:$0xff]
  %v1540 = vld [vmem:[%s1433 + $0x350] sm:$0xff]
  %v1541 = vld [vmem:[%s1433 + $0x358] sm:$0xff]
  %v1542 = vld [vmem:[%s1433 + $0x360] sm:$0xff]
  %v1543 = vld [vmem:[%s1433 + $0x368] sm:$0xff]
  %v1544 = vld [vmem:[%s1433 + $0x370] sm:$0xff]
  %v1545 = vld [vmem:[%s1433 + $0x378] sm:$0xff]
  %v1546 = vld [vmem:[%s1433 + $0x380] sm:$0xff]
  %v1547 = vld [vmem:[%s1433 + $0x388] sm:$0xff]
  %v1548 = vld [vmem:[%s1433 + $0x390] sm:$0xff]
  %v1549 = vld [vmem:[%s1433 + $0x398] sm:$0xff]
  %v1550 = vld [vmem:[%s1433 + $0x3a0] sm:$0xff]
  %v1551 = vld [vmem:[%s1433 + $0x3a8] sm:$0xff]
  %v1552 = vld [vmem:[%s1433 + $0x3b0] sm:$0xff]
  %v1553 = vld [vmem:[%s1433 + $0x3b8] sm:$0xff]
  %v1554 = vld [vmem:[%s1433 + $0x3c0] sm:$0xff]
  %v1555 = vld [vmem:[%s1433 + $0x3c8] sm:$0xff]
  %v1556 = vld [vmem:[%s1433 + $0x3d0] sm:$0xff]
  %v1557 = vld [vmem:[%s1433 + $0x3d8] sm:$0xff]
  %v1558 = vld [vmem:[%s1433 + $0x3e0] sm:$0xff]
  %v1559 = vld [vmem:[%s1433 + $0x3e8] sm:$0xff]
  %v1560 = vld [vmem:[%s1433 + $0x3f0] sm:$0xff]
  %v1561 = vld [vmem:[%s1433 + $0x3f8] sm:$0xff]
  %v1562 = vld [vmem:[%s1433 + $0x400] sm:$0xff]
  %v1563 = vld [vmem:[%s1433 + $0x408] sm:$0xff]
  %v1564 = vld [vmem:[%s1433 + $0x410] sm:$0xff]
  %v1565 = vld [vmem:[%s1433 + $0x418] sm:$0xff]
  %v1566 = vld [vmem:[%s1433 + $0x420] sm:$0xff]
  %v1567 = vld [vmem:[%s1433 + $0x428] sm:$0xff]
  %v1568 = vld [vmem:[%s1433 + $0x430] sm:$0xff]
  %v1569 = vld [vmem:[%s1433 + $0x438] sm:$0xff]
  %v1570 = vld [vmem:[%s1433 + $0x440] sm:$0xff]
  %v1571 = vld [vmem:[%s1433 + $0x448] sm:$0xff]
  %v1572 = vld [vmem:[%s1433 + $0x450] sm:$0xff]
  %v1573 = vld [vmem:[%s1433 + $0x458] sm:$0xff]
  %v1574 = vld [vmem:[%s1433 + $0x460] sm:$0xff]
  %v1575 = vld [vmem:[%s1433 + $0x468] sm:$0xff]
  %v1576 = vld [vmem:[%s1433 + $0x470] sm:$0xff]
  %v1577 = vld [vmem:[%s1433 + $0x478] sm:$0xff]
  %v1578 = vld [vmem:[%s1433 + $0x480] sm:$0xff]
  %v1579 = vld [vmem:[%s1433 + $0x488] sm:$0xff]
  %v1580 = vld [vmem:[%s1433 + $0x490] sm:$0xff]
  %v1581 = vld [vmem:[%s1433 + $0x498] sm:$0xff]
  %v1582 = vld [vmem:[%s1433 + $0x4a0] sm:$0xff]
  %v1583 = vld [vmem:[%s1433 + $0x4a8] sm:$0xff]
  %v1584 = vld [vmem:[%s1433 + $0x4b0] sm:$0xff]
  %v1585 = vld [vmem:[%s1433 + $0x4b8] sm:$0xff]
  %v1586 = vld [vmem:[%s1433 + $0x4c0] sm:$0xff]
  %v1587 = vld [vmem:[%s1433 + $0x4c8] sm:$0xff]
  %v1588 = vld [vmem:[%s1433 + $0x4d0] sm:$0xff]
  %v1589 = vld [vmem:[%s1433 + $0x4d8] sm:$0xff]
  %v1590 = vld [vmem:[%s1433 + $0x4e0] sm:$0xff]
  %v1591 = vld [vmem:[%s1433 + $0x4e8] sm:$0xff]
  %v1592 = vld [vmem:[%s1433 + $0x4f0] sm:$0xff]
  %v1593 = vld [vmem:[%s1433 + $0x4f8] sm:$0xff]
  %v1594 = vld [vmem:[%s1433 + $0x500] sm:$0xff]
  %v1595 = vld [vmem:[%s1433 + $0x508] sm:$0xff]
  %v1596 = vld [vmem:[%s1433 + $0x510] sm:$0xff]
  %v1597 = vld [vmem:[%s1433 + $0x518] sm:$0xff]
  %v1598 = vld [vmem:[%s1433 + $0x520] sm:$0xff]
  %v1599 = vld [vmem:[%s1433 + $0x528] sm:$0xff]
  %v1600 = vld [vmem:[%s1433 + $0x530] sm:$0xff]
  %v1601 = vld [vmem:[%s1433 + $0x538] sm:$0xff]
  %v1602 = vld [vmem:[%s1433 + $0x540] sm:$0xff]
  %v1603 = vld [vmem:[%s1433 + $0x548] sm:$0xff]
  %v1604 = vld [vmem:[%s1433 + $0x550] sm:$0xff]
  %v1605 = vld [vmem:[%s1433 + $0x558] sm:$0xff]
  %v1606 = vld [vmem:[%s1433 + $0x560] sm:$0xff]
  %v1607 = vld [vmem:[%s1433 + $0x568] sm:$0xff]
  %v1608 = vld [vmem:[%s1433 + $0x570] sm:$0xff]
  %v1609 = vld [vmem:[%s1433 + $0x578] sm:$0xff]
  %v1610 = vld [vmem:[%s1433 + $0x580] sm:$0xff]
  %v1611 = vld [vmem:[%s1433 + $0x588] sm:$0xff]
  %v1612 = vld [vmem:[%s1433 + $0x590] sm:$0xff]
  %v1613 = vld [vmem:[%s1433 + $0x598] sm:$0xff]
  %v1614 = vld [vmem:[%s1433 + $0x5a0] sm:$0xff]
  %v1615 = vld [vmem:[%s1433 + $0x5a8] sm:$0xff]
  %v1616 = vld [vmem:[%s1433 + $0x5b0] sm:$0xff]
  %v1617 = vld [vmem:[%s1433 + $0x5b8] sm:$0xff]
  %v1618 = vld [vmem:[%s1433 + $0x5c0] sm:$0xff]
  %v1619 = vld [vmem:[%s1433 + $0x5c8] sm:$0xff]
  %v1620 = vld [vmem:[%s1433 + $0x5d0] sm:$0xff]
  %v1621 = vld [vmem:[%s1433 + $0x5d8] sm:$0xff]
  %v1622 = vld [vmem:[%s1433 + $0x5e0] sm:$0xff]
  %v1623 = vld [vmem:[%s1433 + $0x5e8] sm:$0xff]
  %v1624 = vld [vmem:[%s1433 + $0x5f0] sm:$0xff]
  %v1625 = vld [vmem:[%s1433 + $0x5f8] sm:$0xff]
  %v1626 = vld [vmem:[%s1433 + $0x600] sm:$0xff]
  %v1627 = vld [vmem:[%s1433 + $0x608] sm:$0xff]
  %v1628 = vld [vmem:[%s1433 + $0x610] sm:$0xff]
  %v1629 = vld [vmem:[%s1433 + $0x618] sm:$0xff]
  %v1630 = vld [vmem:[%s1433 + $0x620] sm:$0xff]
  %v1631 = vld [vmem:[%s1433 + $0x628] sm:$0xff]
  %v1632 = vld [vmem:[%s1433 + $0x630] sm:$0xff]
  %v1633 = vld [vmem:[%s1433 + $0x638] sm:$0xff]
  %v1634 = vld [vmem:[%s1433 + $0x640] sm:$0xff]
  %v1635 = vld [vmem:[%s1433 + $0x648] sm:$0xff]
  %v1636 = vld [vmem:[%s1433 + $0x650] sm:$0xff]
  %v1637 = vld [vmem:[%s1433 + $0x658] sm:$0xff]
  %v1638 = vld [vmem:[%s1433 + $0x660] sm:$0xff]
  %v1639 = vld [vmem:[%s1433 + $0x668] sm:$0xff]
  %v1640 = vld [vmem:[%s1433 + $0x670] sm:$0xff]
  %v1641 = vld [vmem:[%s1433 + $0x678] sm:$0xff]
  %v1642 = vld [vmem:[%s1433 + $0x680] sm:$0xff]
  %v1643 = vld [vmem:[%s1433 + $0x688] sm:$0xff]
  %v1644 = vld [vmem:[%s1433 + $0x690] sm:$0xff]
  %v1645 = vld [vmem:[%s1433 + $0x698] sm:$0xff]
  %v1646 = vld [vmem:[%s1433 + $0x6a0] sm:$0xff]
  %v1647 = vld [vmem:[%s1433 + $0x6a8] sm:$0xff]
  %v1648 = vld [vmem:[%s1433 + $0x6b0] sm:$0xff]
  %v1649 = vld [vmem:[%s1433 + $0x6b8] sm:$0xff]
  %v1650 = vld [vmem:[%s1433 + $0x6c0] sm:$0xff]
  %v1651 = vld [vmem:[%s1433 + $0x6c8] sm:$0xff]
  %v1652 = vld [vmem:[%s1433 + $0x6d0] sm:$0xff]
  %v1653 = vld [vmem:[%s1433 + $0x6d8] sm:$0xff]
  %v1654 = vld [vmem:[%s1433 + $0x6e0] sm:$0xff]
  %v1655 = vld [vmem:[%s1433 + $0x6e8] sm:$0xff]
  %v1656 = vld [vmem:[%s1433 + $0x6f0] sm:$0xff]
  %v1657 = vld [vmem:[%s1433 + $0x6f8] sm:$0xff]
  %v1658 = vld [vmem:[%s1433 + $0x700] sm:$0xff]
  %v1659 = vld [vmem:[%s1433 + $0x708] sm:$0xff]
  %v1660 = vld [vmem:[%s1433 + $0x710] sm:$0xff]
  %v1661 = vld [vmem:[%s1433 + $0x718] sm:$0xff]
  %v1662 = vld [vmem:[%s1433 + $0x720] sm:$0xff]
  %v1663 = vld [vmem:[%s1433 + $0x728] sm:$0xff]
  %v1664 = vld [vmem:[%s1433 + $0x730] sm:$0xff]
  %v1665 = vld [vmem:[%s1433 + $0x738] sm:$0xff]
  %v1666 = vld [vmem:[%s1433 + $0x740] sm:$0xff]
  %v1667 = vld [vmem:[%s1433 + $0x748] sm:$0xff]
  %v1668 = vld [vmem:[%s1433 + $0x750] sm:$0xff]
  %v1669 = vld [vmem:[%s1433 + $0x758] sm:$0xff]
  %v1670 = vld [vmem:[%s1433 + $0x760] sm:$0xff]
  %v1671 = vld [vmem:[%s1433 + $0x768] sm:$0xff]
  %v1672 = vld [vmem:[%s1433 + $0x770] sm:$0xff]
  %v1673 = vld [vmem:[%s1433 + $0x778] sm:$0xff]
  %v1674 = vld [vmem:[%s1433 + $0x780] sm:$0xff]
  %v1675 = vld [vmem:[%s1433 + $0x788] sm:$0xff]
  %v1676 = vld [vmem:[%s1433 + $0x790] sm:$0xff]
  %v1677 = vld [vmem:[%s1433 + $0x798] sm:$0xff]
  %v1678 = vld [vmem:[%s1433 + $0x7a0] sm:$0xff]
  %v1679 = vld [vmem:[%s1433 + $0x7a8] sm:$0xff]
  %v1680 = vld [vmem:[%s1433 + $0x7b0] sm:$0xff]
  %v1681 = vld [vmem:[%s1433 + $0x7b8] sm:$0xff]
  %v1682 = vld [vmem:[%s1433 + $0x7c0] sm:$0xff]
  %v1683 = vld [vmem:[%s1433 + $0x7c8] sm:$0xff]
  %v1684 = vld [vmem:[%s1433 + $0x7d0] sm:$0xff]
  %v1685 = vld [vmem:[%s1433 + $0x7d8] sm:$0xff]
  %v1686 = vld [vmem:[%s1433 + $0x7e0] sm:$0xff]
  %v1687 = vld [vmem:[%s1433 + $0x7e8] sm:$0xff]
  %v1688 = vld [vmem:[%s1433 + $0x7f0] sm:$0xff]
  %v1689 = vld [vmem:[%s1433 + $0x7f8] sm:$0xff]
  %v1690 = vpack.c.bf16 %v1435, %v1434
  %v1691 = vpack.c.bf16 %v1437, %v1436
  %v1692 = vpack.c.bf16 %v1439, %v1438
  %v1693 = vpack.c.bf16 %v1441, %v1440
  %v1694 = vpack.c.bf16 %v1443, %v1442
  %v1695 = vpack.c.bf16 %v1445, %v1444
  %v1696 = vpack.c.bf16 %v1447, %v1446
  %v1697 = vpack.c.bf16 %v1449, %v1448
  %v1698 = vpack.c.bf16 %v1451, %v1450
  %v1699 = vpack.c.bf16 %v1453, %v1452
  %v1700 = vpack.c.bf16 %v1455, %v1454
  %v1701 = vpack.c.bf16 %v1457, %v1456
  %v1702 = vpack.c.bf16 %v1459, %v1458
  %v1703 = vpack.c.bf16 %v1461, %v1460
  %v1704 = vpack.c.bf16 %v1463, %v1462
  %v1705 = vpack.c.bf16 %v1465, %v1464
  %v1706 = vpack.c.bf16 %v1467, %v1466
  %v1707 = vpack.c.bf16 %v1469, %v1468
  %v1708 = vpack.c.bf16 %v1471, %v1470
  %v1709 = vpack.c.bf16 %v1473, %v1472
  %v1710 = vpack.c.bf16 %v1475, %v1474
  %v1711 = vpack.c.bf16 %v1477, %v1476
  %v1712 = vpack.c.bf16 %v1479, %v1478
  %v1713 = vpack.c.bf16 %v1481, %v1480
  %v1714 = vpack.c.bf16 %v1483, %v1482
  %v1715 = vpack.c.bf16 %v1485, %v1484
  %v1716 = vpack.c.bf16 %v1487, %v1486
  %v1717 = vpack.c.bf16 %v1489, %v1488
  %v1718 = vpack.c.bf16 %v1491, %v1490
  %v1719 = vpack.c.bf16 %v1493, %v1492
  %v1720 = vpack.c.bf16 %v1495, %v1494
  %v1721 = vpack.c.bf16 %v1497, %v1496
  %v1722 = vpack.c.bf16 %v1499, %v1498
  %v1723 = vpack.c.bf16 %v1501, %v1500
  %v1724 = vpack.c.bf16 %v1503, %v1502
  %v1725 = vpack.c.bf16 %v1505, %v1504
  %v1726 = vpack.c.bf16 %v1507, %v1506
  %v1727 = vpack.c.bf16 %v1509, %v1508
  %v1728 = vpack.c.bf16 %v1511, %v1510
  %v1729 = vpack.c.bf16 %v1513, %v1512
  %v1730 = vpack.c.bf16 %v1515, %v1514
  %v1731 = vpack.c.bf16 %v1517, %v1516
  %v1732 = vpack.c.bf16 %v1519, %v1518
  %v1733 = vpack.c.bf16 %v1521, %v1520
  %v1734 = vpack.c.bf16 %v1523, %v1522
  %v1735 = vpack.c.bf16 %v1525, %v1524
  %v1736 = vpack.c.bf16 %v1527, %v1526
  %v1737 = vpack.c.bf16 %v1529, %v1528
  %v1738 = vpack.c.bf16 %v1531, %v1530
  %v1739 = vpack.c.bf16 %v1533, %v1532
  %v1740 = vpack.c.bf16 %v1535, %v1534
  %v1741 = vpack.c.bf16 %v1537, %v1536
  %v1742 = vpack.c.bf16 %v1539, %v1538
  %v1743 = vpack.c.bf16 %v1541, %v1540
  %v1744 = vpack.c.bf16 %v1543, %v1542
  %v1745 = vpack.c.bf16 %v1545, %v1544
  %v1746 = vpack.c.bf16 %v1547, %v1546
  %v1747 = vpack.c.bf16 %v1549, %v1548
  %v1748 = vpack.c.bf16 %v1551, %v1550
  %v1749 = vpack.c.bf16 %v1553, %v1552
  %v1750 = vpack.c.bf16 %v1555, %v1554
  %v1751 = vpack.c.bf16 %v1557, %v1556
  %v1752 = vpack.c.bf16 %v1559, %v1558
  %v1753 = vpack.c.bf16 %v1561, %v1560
  %v1754 = vpack.c.bf16 %v1563, %v1562
  %v1755 = vpack.c.bf16 %v1565, %v1564
  %v1756 = vpack.c.bf16 %v1567, %v1566
  %v1757 = vpack.c.bf16 %v1569, %v1568
  %v1758 = vpack.c.bf16 %v1571, %v1570
  %v1759 = vpack.c.bf16 %v1573, %v1572
  %v1760 = vpack.c.bf16 %v1575, %v1574
  %v1761 = vpack.c.bf16 %v1577, %v1576
  %v1762 = vpack.c.bf16 %v1579, %v1578
  %v1763 = vpack.c.bf16 %v1581, %v1580
  %v1764 = vpack.c.bf16 %v1583, %v1582
  %v1765 = vpack.c.bf16 %v1585, %v1584
  %v1766 = vpack.c.bf16 %v1587, %v1586
  %v1767 = vpack.c.bf16 %v1589, %v1588
  %v1768 = vpack.c.bf16 %v1591, %v1590
  %v1769 = vpack.c.bf16 %v1593, %v1592
  %v1770 = vpack.c.bf16 %v1595, %v1594
  %v1771 = vpack.c.bf16 %v1597, %v1596
  %v1772 = vpack.c.bf16 %v1599, %v1598
  %v1773 = vpack.c.bf16 %v1601, %v1600
  %v1774 = vpack.c.bf16 %v1603, %v1602
  %v1775 = vpack.c.bf16 %v1605, %v1604
  %v1776 = vpack.c.bf16 %v1607, %v1606
  %v1777 = vpack.c.bf16 %v1609, %v1608
  %v1778 = vpack.c.bf16 %v1611, %v1610
  %v1779 = vpack.c.bf16 %v1613, %v1612
  %v1780 = vpack.c.bf16 %v1615, %v1614
  %v1781 = vpack.c.bf16 %v1617, %v1616
  %v1782 = vpack.c.bf16 %v1619, %v1618
  %v1783 = vpack.c.bf16 %v1621, %v1620
  %v1784 = vpack.c.bf16 %v1623, %v1622
  %v1785 = vpack.c.bf16 %v1625, %v1624
  %v1786 = vpack.c.bf16 %v1627, %v1626
  %v1787 = vpack.c.bf16 %v1629, %v1628
  %v1788 = vpack.c.bf16 %v1631, %v1630
  %v1789 = vpack.c.bf16 %v1633, %v1632
  %v1790 = vpack.c.bf16 %v1635, %v1634
  %v1791 = vpack.c.bf16 %v1637, %v1636
  %v1792 = vpack.c.bf16 %v1639, %v1638
  %v1793 = vpack.c.bf16 %v1641, %v1640
  %v1794 = vpack.c.bf16 %v1643, %v1642
  %v1795 = vpack.c.bf16 %v1645, %v1644
  %v1796 = vpack.c.bf16 %v1647, %v1646
  %v1797 = vpack.c.bf16 %v1649, %v1648
  %v1798 = vpack.c.bf16 %v1651, %v1650
  %v1799 = vpack.c.bf16 %v1653, %v1652
  %v1800 = vpack.c.bf16 %v1655, %v1654
  %v1801 = vpack.c.bf16 %v1657, %v1656
  %v1802 = vpack.c.bf16 %v1659, %v1658
  %v1803 = vpack.c.bf16 %v1661, %v1660
  %v1804 = vpack.c.bf16 %v1663, %v1662
  %v1805 = vpack.c.bf16 %v1665, %v1664
  %v1806 = vpack.c.bf16 %v1667, %v1666
  %v1807 = vpack.c.bf16 %v1669, %v1668
  %v1808 = vpack.c.bf16 %v1671, %v1670
  %v1809 = vpack.c.bf16 %v1673, %v1672
  %v1810 = vpack.c.bf16 %v1675, %v1674
  %v1811 = vpack.c.bf16 %v1677, %v1676
  %v1812 = vpack.c.bf16 %v1679, %v1678
  %v1813 = vpack.c.bf16 %v1681, %v1680
  %v1814 = vpack.c.bf16 %v1683, %v1682
  %v1815 = vpack.c.bf16 %v1685, %v1684
  %v1816 = vpack.c.bf16 %v1687, %v1686
  %v1817 = vpack.c.bf16 %v1689, %v1688
  %1818 = vmatprep.subr.bf16.mxu0 0
  %1819 = vmatpush1.bf16.msra.mxu0 %v1697
  %1820 = vmatprep.subr.bf16.mxu0 0
  %1821 = vmatpush1.bf16.msra.mxu0 %v1696
  %1822 = vmatprep.subr.bf16.mxu0 0
  %1823 = vmatpush1.bf16.msra.mxu0 %v1695
  %1824 = vmatprep.subr.bf16.mxu0 0
  %1825 = vmatpush1.bf16.msra.mxu0 %v1694
  %1826 = vmatprep.subr.bf16.mxu0 0
  %1827 = vmatpush1.bf16.msra.mxu0 %v1693
  %1828 = vmatprep.subr.bf16.mxu0 0
  %1829 = vmatpush1.bf16.msra.mxu0 %v1692
  %1830 = vmatprep.subr.bf16.mxu0 0
  %1831 = vmatpush1.bf16.msra.mxu0 %v1691
  %1832 = vmatprep.subr.bf16.mxu0 0
  %1833 = vmatpush1.bf16.msra.mxu0 %v1690
  %1834 = vmatprep.subr.bf16.mxu0 0
  %1835 = vmatpush2.bf16.msra.mxu0 %v1705
  %1836 = vmatprep.subr.bf16.mxu0 0
  %1837 = vmatpush2.bf16.msra.mxu0 %v1704
  %1838 = vmatprep.subr.bf16.mxu0 0
  %1839 = vmatpush2.bf16.msra.mxu0 %v1703
  %1840 = vmatprep.subr.bf16.mxu0 0
  %1841 = vmatpush2.bf16.msra.mxu0 %v1702
  %1842 = vmatprep.subr.bf16.mxu0 0
  %1843 = vmatpush2.bf16.msra.mxu0 %v1701
  %1844 = vmatprep.subr.bf16.mxu0 0
  %1845 = vmatpush2.bf16.msra.mxu0 %v1700
  %1846 = vmatprep.subr.bf16.mxu0 0
  %1847 = vmatpush2.bf16.msra.mxu0 %v1699
  %1848 = vmatprep.subr.bf16.mxu0 0
  %1849 = vmatpush2.bf16.msra.mxu0 %v1698
  %1850 = vmatprep.mubr.bf16.mxu0 %v712
  %1851 = vmatmul.mubr.bf16.gmra.mxu0 %v711
  %v1852 = vpop.f32.mrf.mxu0
  %v1853 = vadd.f32 %v482, %v1852
  %v1854 = vpop.f32.mrf.mxu0
  %v1855 = vpop.f32.mrf.mxu0
  %v1856 = vadd.f32 %v487, %v1855
  %v1857 = vpop.f32.mrf.mxu0
  %1858 = vmatprep.mubr.bf16.mxu0 %v728
  %1859 = vmatmul.mubr.bf16.gmra.mxu0 %v727
  %v1860 = vpop.f32.mrf.mxu0
  %v1861 = vadd.f32 %v492, %v1860
  %v1862 = vpop.f32.mrf.mxu0
  %v1863 = vpop.f32.mrf.mxu0
  %v1864 = vadd.f32 %v497, %v1863
  %v1865 = vpop.f32.mrf.mxu0
  %1866 = vmatprep.mubr.bf16.mxu0 %v744
  %1867 = vmatmul.mubr.bf16.gmra.mxu0 %v743
  %v1868 = vpop.f32.mrf.mxu0
  %v1869 = vadd.f32 %v502, %v1868
  %v1870 = vpop.f32.mrf.mxu0
  %v1871 = vpop.f32.mrf.mxu0
  %v1872 = vadd.f32 %v507, %v1871
  %v1873 = vpop.f32.mrf.mxu0
  %1874 = vmatprep.mubr.bf16.mxu0 %v760
  %1875 = vmatmul.mubr.bf16.gmra.mxu0 %v759
  %v1876 = vpop.f32.mrf.mxu0
  %v1877 = vadd.f32 %v512, %v1876
  %v1878 = vpop.f32.mrf.mxu0
  %v1879 = vpop.f32.mrf.mxu0
  %v1880 = vadd.f32 %v517, %v1879
  %v1881 = vpop.f32.mrf.mxu0
  %1882 = vdwg.mxu0
  %1883 = vmatprep.subr.bf16.mxu0 0
  %1884 = vmatpush1.bf16.msra.mxu0 %v1713
  %1885 = vmatprep.subr.bf16.mxu0 0
  %1886 = vmatpush1.bf16.msra.mxu0 %v1712
  %1887 = vmatprep.subr.bf16.mxu0 0
  %1888 = vmatpush1.bf16.msra.mxu0 %v1711
  %1889 = vmatprep.subr.bf16.mxu0 0
  %1890 = vmatpush1.bf16.msra.mxu0 %v1710
  %1891 = vmatprep.subr.bf16.mxu0 0
  %1892 = vmatpush1.bf16.msra.mxu0 %v1709
  %1893 = vmatprep.subr.bf16.mxu0 0
  %1894 = vmatpush1.bf16.msra.mxu0 %v1708
  %1895 = vmatprep.subr.bf16.mxu0 0
  %1896 = vmatpush1.bf16.msra.mxu0 %v1707
  %1897 = vmatprep.subr.bf16.mxu0 0
  %1898 = vmatpush1.bf16.msra.mxu0 %v1706
  %1899 = vmatprep.subr.bf16.mxu0 0
  %1900 = vmatpush2.bf16.msra.mxu0 %v1721
  %1901 = vmatprep.subr.bf16.mxu0 0
  %1902 = vmatpush2.bf16.msra.mxu0 %v1720
  %1903 = vmatprep.subr.bf16.mxu0 0
  %1904 = vmatpush2.bf16.msra.mxu0 %v1719
  %1905 = vmatprep.subr.bf16.mxu0 0
  %1906 = vmatpush2.bf16.msra.mxu0 %v1718
  %1907 = vmatprep.subr.bf16.mxu0 0
  %1908 = vmatpush2.bf16.msra.mxu0 %v1717
  %1909 = vmatprep.subr.bf16.mxu0 0
  %1910 = vmatpush2.bf16.msra.mxu0 %v1716
  %1911 = vmatprep.subr.bf16.mxu0 0
  %1912 = vmatpush2.bf16.msra.mxu0 %v1715
  %1913 = vmatprep.subr.bf16.mxu0 0
  %1914 = vmatpush2.bf16.msra.mxu0 %v1714
  %1915 = vmatprep.mubr.bf16.mxu0 %v714
  %1916 = vmatmul.mubr.bf16.gmra.mxu0 %v713
  %v1917 = vpop.f32.mrf.mxu0
  %v1918 = vadd.f32 %v1853, %v1917
  %v1919 = vpop.f32.mrf.mxu0
  %v1920 = vpop.f32.mrf.mxu0
  %v1921 = vadd.f32 %v1856, %v1920
  %v1922 = vpop.f32.mrf.mxu0
  %1923 = vmatprep.mubr.bf16.mxu0 %v730
  %1924 = vmatmul.mubr.bf16.gmra.mxu0 %v729
  %v1925 = vpop.f32.mrf.mxu0
  %v1926 = vadd.f32 %v1861, %v1925
  %v1927 = vpop.f32.mrf.mxu0
  %v1928 = vpop.f32.mrf.mxu0
  %v1929 = vadd.f32 %v1864, %v1928
  %v1930 = vpop.f32.mrf.mxu0
  %1931 = vmatprep.mubr.bf16.mxu0 %v746
  %1932 = vmatmul.mubr.bf16.gmra.mxu0 %v745
  %v1933 = vpop.f32.mrf.mxu0
  %v1934 = vadd.f32 %v1869, %v1933
  %v1935 = vpop.f32.mrf.mxu0
  %v1936 = vpop.f32.mrf.mxu0
  %v1937 = vadd.f32 %v1872, %v1936
  %v1938 = vpop.f32.mrf.mxu0
  %1939 = vmatprep.mubr.bf16.mxu0 %v762
  %1940 = vmatmul.mubr.bf16.gmra.mxu0 %v761
  %v1941 = vpop.f32.mrf.mxu0
  %v1942 = vadd.f32 %v1877, %v1941
  %v1943 = vpop.f32.mrf.mxu0
  %v1944 = vpop.f32.mrf.mxu0
  %v1945 = vadd.f32 %v1880, %v1944
  %v1946 = vpop.f32.mrf.mxu0
  %1947 = vdwg.mxu0
  %1948 = vmatprep.subr.bf16.mxu0 0
  %1949 = vmatpush1.bf16.msra.mxu0 %v1729
  %1950 = vmatprep.subr.bf16.mxu0 0
  %1951 = vmatpush1.bf16.msra.mxu0 %v1728
  %1952 = vmatprep.subr.bf16.mxu0 0
  %1953 = vmatpush1.bf16.msra.mxu0 %v1727
  %1954 = vmatprep.subr.bf16.mxu0 0
  %1955 = vmatpush1.bf16.msra.mxu0 %v1726
  %1956 = vmatprep.subr.bf16.mxu0 0
  %1957 = vmatpush1.bf16.msra.mxu0 %v1725
  %1958 = vmatprep.subr.bf16.mxu0 0
  %1959 = vmatpush1.bf16.msra.mxu0 %v1724
  %1960 = vmatprep.subr.bf16.mxu0 0
  %1961 = vmatpush1.bf16.msra.mxu0 %v1723
  %1962 = vmatprep.subr.bf16.mxu0 0
  %1963 = vmatpush1.bf16.msra.mxu0 %v1722
  %1964 = vmatprep.subr.bf16.mxu0 0
  %1965 = vmatpush2.bf16.msra.mxu0 %v1737
  %1966 = vmatprep.subr.bf16.mxu0 0
  %1967 = vmatpush2.bf16.msra.mxu0 %v1736
  %1968 = vmatprep.subr.bf16.mxu0 0
  %1969 = vmatpush2.bf16.msra.mxu0 %v1735
  %1970 = vmatprep.subr.bf16.mxu0 0
  %1971 = vmatpush2.bf16.msra.mxu0 %v1734
  %1972 = vmatprep.subr.bf16.mxu0 0
  %1973 = vmatpush2.bf16.msra.mxu0 %v1733
  %1974 = vmatprep.subr.bf16.mxu0 0
  %1975 = vmatpush2.bf16.msra.mxu0 %v1732
  %1976 = vmatprep.subr.bf16.mxu0 0
  %1977 = vmatpush2.bf16.msra.mxu0 %v1731
  %1978 = vmatprep.subr.bf16.mxu0 0
  %1979 = vmatpush2.bf16.msra.mxu0 %v1730
  %1980 = vmatprep.mubr.bf16.mxu0 %v716
  %1981 = vmatmul.mubr.bf16.gmra.mxu0 %v715
  %v1982 = vpop.f32.mrf.mxu0
  %v1983 = vadd.f32 %v1918, %v1982
  %v1984 = vpop.f32.mrf.mxu0
  %v1985 = vpop.f32.mrf.mxu0
  %v1986 = vadd.f32 %v1921, %v1985
  %v1987 = vpop.f32.mrf.mxu0
  %1988 = vmatprep.mubr.bf16.mxu0 %v732
  %1989 = vmatmul.mubr.bf16.gmra.mxu0 %v731
  %v1990 = vpop.f32.mrf.mxu0
  %v1991 = vadd.f32 %v1926, %v1990
  %v1992 = vpop.f32.mrf.mxu0
  %v1993 = vpop.f32.mrf.mxu0
  %v1994 = vadd.f32 %v1929, %v1993
  %v1995 = vpop.f32.mrf.mxu0
  %1996 = vmatprep.mubr.bf16.mxu0 %v748
  %1997 = vmatmul.mubr.bf16.gmra.mxu0 %v747
  %v1998 = vpop.f32.mrf.mxu0
  %v1999 = vadd.f32 %v1934, %v1998
  %v2000 = vpop.f32.mrf.mxu0
  %v2001 = vpop.f32.mrf.mxu0
  %v2002 = vadd.f32 %v1937, %v2001
  %v2003 = vpop.f32.mrf.mxu0
  %2004 = vmatprep.mubr.bf16.mxu0 %v764
  %2005 = vmatmul.mubr.bf16.gmra.mxu0 %v763
  %v2006 = vpop.f32.mrf.mxu0
  %v2007 = vadd.f32 %v1942, %v2006
  %v2008 = vpop.f32.mrf.mxu0
  %v2009 = vpop.f32.mrf.mxu0
  %v2010 = vadd.f32 %v1945, %v2009
  %v2011 = vpop.f32.mrf.mxu0
  %2012 = vdwg.mxu0
  %2013 = vmatprep.subr.bf16.mxu0 0
  %2014 = vmatpush1.bf16.msra.mxu0 %v1745
  %2015 = vmatprep.subr.bf16.mxu0 0
  %2016 = vmatpush1.bf16.msra.mxu0 %v1744
  %2017 = vmatprep.subr.bf16.mxu0 0
  %2018 = vmatpush1.bf16.msra.mxu0 %v1743
  %2019 = vmatprep.subr.bf16.mxu0 0
  %2020 = vmatpush1.bf16.msra.mxu0 %v1742
  %2021 = vmatprep.subr.bf16.mxu0 0
  %2022 = vmatpush1.bf16.msra.mxu0 %v1741
  %2023 = vmatprep.subr.bf16.mxu0 0
  %2024 = vmatpush1.bf16.msra.mxu0 %v1740
  %2025 = vmatprep.subr.bf16.mxu0 0
  %2026 = vmatpush1.bf16.msra.mxu0 %v1739
  %2027 = vmatprep.subr.bf16.mxu0 0
  %2028 = vmatpush1.bf16.msra.mxu0 %v1738
  %2029 = vmatprep.subr.bf16.mxu0 0
  %2030 = vmatpush2.bf16.msra.mxu0 %v1753
  %2031 = vmatprep.subr.bf16.mxu0 0
  %2032 = vmatpush2.bf16.msra.mxu0 %v1752
  %2033 = vmatprep.subr.bf16.mxu0 0
  %2034 = vmatpush2.bf16.msra.mxu0 %v1751
  %2035 = vmatprep.subr.bf16.mxu0 0
  %2036 = vmatpush2.bf16.msra.mxu0 %v1750
  %2037 = vmatprep.subr.bf16.mxu0 0
  %2038 = vmatpush2.bf16.msra.mxu0 %v1749
  %2039 = vmatprep.subr.bf16.mxu0 0
  %2040 = vmatpush2.bf16.msra.mxu0 %v1748
  %2041 = vmatprep.subr.bf16.mxu0 0
  %2042 = vmatpush2.bf16.msra.mxu0 %v1747
  %2043 = vmatprep.subr.bf16.mxu0 0
  %2044 = vmatpush2.bf16.msra.mxu0 %v1746
  %2045 = vmatprep.mubr.bf16.mxu0 %v718
  %2046 = vmatmul.mubr.bf16.gmra.mxu0 %v717
  %v2047 = vpop.f32.mrf.mxu0
  %v2048 = vadd.f32 %v1983, %v2047
  %v2049 = vpop.f32.mrf.mxu0
  %v2050 = vpop.f32.mrf.mxu0
  %v2051 = vadd.f32 %v1986, %v2050
  %v2052 = vpop.f32.mrf.mxu0
  %2053 = vmatprep.mubr.bf16.mxu0 %v734
  %2054 = vmatmul.mubr.bf16.gmra.mxu0 %v733
  %v2055 = vpop.f32.mrf.mxu0
  %v2056 = vadd.f32 %v1991, %v2055
  %v2057 = vpop.f32.mrf.mxu0
  %v2058 = vpop.f32.mrf.mxu0
  %v2059 = vadd.f32 %v1994, %v2058
  %v2060 = vpop.f32.mrf.mxu0
  %2061 = vmatprep.mubr.bf16.mxu0 %v750
  %2062 = vmatmul.mubr.bf16.gmra.mxu0 %v749
  %v2063 = vpop.f32.mrf.mxu0
  %v2064 = vadd.f32 %v1999, %v2063
  %v2065 = vpop.f32.mrf.mxu0
  %v2066 = vpop.f32.mrf.mxu0
  %v2067 = vadd.f32 %v2002, %v2066
  %v2068 = vpop.f32.mrf.mxu0
  %2069 = vmatprep.mubr.bf16.mxu0 %v766
  %2070 = vmatmul.mubr.bf16.gmra.mxu0 %v765
  %v2071 = vpop.f32.mrf.mxu0
  %v2072 = vadd.f32 %v2007, %v2071
  %v2073 = vpop.f32.mrf.mxu0
  %v2074 = vpop.f32.mrf.mxu0
  %v2075 = vadd.f32 %v2010, %v2074
  %v2076 = vpop.f32.mrf.mxu0
  %2077 = vdwg.mxu0
  %2078 = vmatprep.subr.bf16.mxu0 0
  %2079 = vmatpush1.bf16.msra.mxu0 %v1761
  %2080 = vmatprep.subr.bf16.mxu0 0
  %2081 = vmatpush1.bf16.msra.mxu0 %v1760
  %2082 = vmatprep.subr.bf16.mxu0 0
  %2083 = vmatpush1.bf16.msra.mxu0 %v1759
  %2084 = vmatprep.subr.bf16.mxu0 0
  %2085 = vmatpush1.bf16.msra.mxu0 %v1758
  %2086 = vmatprep.subr.bf16.mxu0 0
  %2087 = vmatpush1.bf16.msra.mxu0 %v1757
  %2088 = vmatprep.subr.bf16.mxu0 0
  %2089 = vmatpush1.bf16.msra.mxu0 %v1756
  %2090 = vmatprep.subr.bf16.mxu0 0
  %2091 = vmatpush1.bf16.msra.mxu0 %v1755
  %2092 = vmatprep.subr.bf16.mxu0 0
  %2093 = vmatpush1.bf16.msra.mxu0 %v1754
  %2094 = vmatprep.subr.bf16.mxu0 0
  %2095 = vmatpush2.bf16.msra.mxu0 %v1769
  %2096 = vmatprep.subr.bf16.mxu0 0
  %2097 = vmatpush2.bf16.msra.mxu0 %v1768
  %2098 = vmatprep.subr.bf16.mxu0 0
  %2099 = vmatpush2.bf16.msra.mxu0 %v1767
  %2100 = vmatprep.subr.bf16.mxu0 0
  %2101 = vmatpush2.bf16.msra.mxu0 %v1766
  %2102 = vmatprep.subr.bf16.mxu0 0
  %2103 = vmatpush2.bf16.msra.mxu0 %v1765
  %2104 = vmatprep.subr.bf16.mxu0 0
  %2105 = vmatpush2.bf16.msra.mxu0 %v1764
  %2106 = vmatprep.subr.bf16.mxu0 0
  %2107 = vmatpush2.bf16.msra.mxu0 %v1763
  %2108 = vmatprep.subr.bf16.mxu0 0
  %2109 = vmatpush2.bf16.msra.mxu0 %v1762
  %2110 = vmatprep.mubr.bf16.mxu0 %v720
  %2111 = vmatmul.mubr.bf16.gmra.mxu0 %v719
  %v2112 = vpop.f32.mrf.mxu0
  %v2113 = vadd.f32 %v2048, %v2112
  %v2114 = vpop.f32.mrf.mxu0
  %v2115 = vpop.f32.mrf.mxu0
  %v2116 = vadd.f32 %v2051, %v2115
  %v2117 = vpop.f32.mrf.mxu0
  %2118 = vmatprep.mubr.bf16.mxu0 %v736
  %2119 = vmatmul.mubr.bf16.gmra.mxu0 %v735
  %v2120 = vpop.f32.mrf.mxu0
  %v2121 = vadd.f32 %v2056, %v2120
  %v2122 = vpop.f32.mrf.mxu0
  %v2123 = vpop.f32.mrf.mxu0
  %v2124 = vadd.f32 %v2059, %v2123
  %v2125 = vpop.f32.mrf.mxu0
  %2126 = vmatprep.mubr.bf16.mxu0 %v752
  %2127 = vmatmul.mubr.bf16.gmra.mxu0 %v751
  %v2128 = vpop.f32.mrf.mxu0
  %v2129 = vadd.f32 %v2064, %v2128
  %v2130 = vpop.f32.mrf.mxu0
  %v2131 = vpop.f32.mrf.mxu0
  %v2132 = vadd.f32 %v2067, %v2131
  %v2133 = vpop.f32.mrf.mxu0
  %2134 = vmatprep.mubr.bf16.mxu0 %v768
  %2135 = vmatmul.mubr.bf16.gmra.mxu0 %v767
  %v2136 = vpop.f32.mrf.mxu0
  %v2137 = vadd.f32 %v2072, %v2136
  %v2138 = vpop.f32.mrf.mxu0
  %v2139 = vpop.f32.mrf.mxu0
  %v2140 = vadd.f32 %v2075, %v2139
  %v2141 = vpop.f32.mrf.mxu0
  %2142 = vdwg.mxu0
  %2143 = vmatprep.subr.bf16.mxu0 0
  %2144 = vmatpush1.bf16.msra.mxu0 %v1777
  %2145 = vmatprep.subr.bf16.mxu0 0
  %2146 = vmatpush1.bf16.msra.mxu0 %v1776
  %2147 = vmatprep.subr.bf16.mxu0 0
  %2148 = vmatpush1.bf16.msra.mxu0 %v1775
  %2149 = vmatprep.subr.bf16.mxu0 0
  %2150 = vmatpush1.bf16.msra.mxu0 %v1774
  %2151 = vmatprep.subr.bf16.mxu0 0
  %2152 = vmatpush1.bf16.msra.mxu0 %v1773
  %2153 = vmatprep.subr.bf16.mxu0 0
  %2154 = vmatpush1.bf16.msra.mxu0 %v1772
  %2155 = vmatprep.subr.bf16.mxu0 0
  %2156 = vmatpush1.bf16.msra.mxu0 %v1771
  %2157 = vmatprep.subr.bf16.mxu0 0
  %2158 = vmatpush1.bf16.msra.mxu0 %v1770
  %2159 = vmatprep.subr.bf16.mxu0 0
  %2160 = vmatpush2.bf16.msra.mxu0 %v1785
  %2161 = vmatprep.subr.bf16.mxu0 0
  %2162 = vmatpush2.bf16.msra.mxu0 %v1784
  %2163 = vmatprep.subr.bf16.mxu0 0
  %2164 = vmatpush2.bf16.msra.mxu0 %v1783
  %2165 = vmatprep.subr.bf16.mxu0 0
  %2166 = vmatpush2.bf16.msra.mxu0 %v1782
  %2167 = vmatprep.subr.bf16.mxu0 0
  %2168 = vmatpush2.bf16.msra.mxu0 %v1781
  %2169 = vmatprep.subr.bf16.mxu0 0
  %2170 = vmatpush2.bf16.msra.mxu0 %v1780
  %2171 = vmatprep.subr.bf16.mxu0 0
  %2172 = vmatpush2.bf16.msra.mxu0 %v1779
  %2173 = vmatprep.subr.bf16.mxu0 0
  %2174 = vmatpush2.bf16.msra.mxu0 %v1778
  %2175 = vmatprep.mubr.bf16.mxu0 %v722
  %2176 = vmatmul.mubr.bf16.gmra.mxu0 %v721
  %v2177 = vpop.f32.mrf.mxu0
  %v2178 = vadd.f32 %v2113, %v2177
  %v2179 = vpop.f32.mrf.mxu0
  %v2180 = vpop.f32.mrf.mxu0
  %v2181 = vadd.f32 %v2116, %v2180
  %v2182 = vpop.f32.mrf.mxu0
  %2183 = vmatprep.mubr.bf16.mxu0 %v738
  %2184 = vmatmul.mubr.bf16.gmra.mxu0 %v737
  %v2185 = vpop.f32.mrf.mxu0
  %v2186 = vadd.f32 %v2121, %v2185
  %v2187 = vpop.f32.mrf.mxu0
  %v2188 = vpop.f32.mrf.mxu0
  %v2189 = vadd.f32 %v2124, %v2188
  %v2190 = vpop.f32.mrf.mxu0
  %2191 = vmatprep.mubr.bf16.mxu0 %v754
  %2192 = vmatmul.mubr.bf16.gmra.mxu0 %v753
  %v2193 = vpop.f32.mrf.mxu0
  %v2194 = vadd.f32 %v2129, %v2193
  %v2195 = vpop.f32.mrf.mxu0
  %v2196 = vpop.f32.mrf.mxu0
  %v2197 = vadd.f32 %v2132, %v2196
  %v2198 = vpop.f32.mrf.mxu0
  %2199 = vmatprep.mubr.bf16.mxu0 %v770
  %2200 = vmatmul.mubr.bf16.gmra.mxu0 %v769
  %v2201 = vpop.f32.mrf.mxu0
  %v2202 = vadd.f32 %v2137, %v2201
  %v2203 = vpop.f32.mrf.mxu0
  %v2204 = vpop.f32.mrf.mxu0
  %v2205 = vadd.f32 %v2140, %v2204
  %v2206 = vpop.f32.mrf.mxu0
  %2207 = vdwg.mxu0
  %2208 = vmatprep.subr.bf16.mxu0 0
  %2209 = vmatpush1.bf16.msra.mxu0 %v1793
  %2210 = vmatprep.subr.bf16.mxu0 0
  %2211 = vmatpush1.bf16.msra.mxu0 %v1792
  %2212 = vmatprep.subr.bf16.mxu0 0
  %2213 = vmatpush1.bf16.msra.mxu0 %v1791
  %2214 = vmatprep.subr.bf16.mxu0 0
  %2215 = vmatpush1.bf16.msra.mxu0 %v1790
  %2216 = vmatprep.subr.bf16.mxu0 0
  %2217 = vmatpush1.bf16.msra.mxu0 %v1789
  %2218 = vmatprep.subr.bf16.mxu0 0
  %2219 = vmatpush1.bf16.msra.mxu0 %v1788
  %2220 = vmatprep.subr.bf16.mxu0 0
  %2221 = vmatpush1.bf16.msra.mxu0 %v1787
  %2222 = vmatprep.subr.bf16.mxu0 0
  %2223 = vmatpush1.bf16.msra.mxu0 %v1786
  %2224 = vmatprep.subr.bf16.mxu0 0
  %2225 = vmatpush2.bf16.msra.mxu0 %v1801
  %2226 = vmatprep.subr.bf16.mxu0 0
  %2227 = vmatpush2.bf16.msra.mxu0 %v1800
  %2228 = vmatprep.subr.bf16.mxu0 0
  %2229 = vmatpush2.bf16.msra.mxu0 %v1799
  %2230 = vmatprep.subr.bf16.mxu0 0
  %2231 = vmatpush2.bf16.msra.mxu0 %v1798
  %2232 = vmatprep.subr.bf16.mxu0 0
  %2233 = vmatpush2.bf16.msra.mxu0 %v1797
  %2234 = vmatprep.subr.bf16.mxu0 0
  %2235 = vmatpush2.bf16.msra.mxu0 %v1796
  %2236 = vmatprep.subr.bf16.mxu0 0
  %2237 = vmatpush2.bf16.msra.mxu0 %v1795
  %2238 = vmatprep.subr.bf16.mxu0 0
  %2239 = vmatpush2.bf16.msra.mxu0 %v1794
  %2240 = vmatprep.mubr.bf16.mxu0 %v724
  %2241 = vmatmul.mubr.bf16.gmra.mxu0 %v723
  %v2242 = vpop.f32.mrf.mxu0
  %v2243 = vadd.f32 %v2178, %v2242
  %v2244 = vpop.f32.mrf.mxu0
  %v2245 = vpop.f32.mrf.mxu0
  %v2246 = vadd.f32 %v2181, %v2245
  %v2247 = vpop.f32.mrf.mxu0
  %2248 = vmatprep.mubr.bf16.mxu0 %v740
  %2249 = vmatmul.mubr.bf16.gmra.mxu0 %v739
  %v2250 = vpop.f32.mrf.mxu0
  %v2251 = vadd.f32 %v2186, %v2250
  %v2252 = vpop.f32.mrf.mxu0
  %v2253 = vpop.f32.mrf.mxu0
  %v2254 = vadd.f32 %v2189, %v2253
  %v2255 = vpop.f32.mrf.mxu0
  %2256 = vmatprep.mubr.bf16.mxu0 %v756
  %2257 = vmatmul.mubr.bf16.gmra.mxu0 %v755
  %v2258 = vpop.f32.mrf.mxu0
  %v2259 = vadd.f32 %v2194, %v2258
  %v2260 = vpop.f32.mrf.mxu0
  %v2261 = vpop.f32.mrf.mxu0
  %v2262 = vadd.f32 %v2197, %v2261
  %v2263 = vpop.f32.mrf.mxu0
  %2264 = vmatprep.mubr.bf16.mxu0 %v772
  %2265 = vmatmul.mubr.bf16.gmra.mxu0 %v771
  %v2266 = vpop.f32.mrf.mxu0
  %v2267 = vadd.f32 %v2202, %v2266
  %v2268 = vpop.f32.mrf.mxu0
  %v2269 = vpop.f32.mrf.mxu0
  %v2270 = vadd.f32 %v2205, %v2269
  %v2271 = vpop.f32.mrf.mxu0
  %2272 = vdwg.mxu0
  %2273 = vmatprep.subr.bf16.mxu0 0
  %2274 = vmatpush1.bf16.msra.mxu0 %v1809
  %2275 = vmatprep.subr.bf16.mxu0 0
  %2276 = vmatpush1.bf16.msra.mxu0 %v1808
  %2277 = vmatprep.subr.bf16.mxu0 0
  %2278 = vmatpush1.bf16.msra.mxu0 %v1807
  %2279 = vmatprep.subr.bf16.mxu0 0
  %2280 = vmatpush1.bf16.msra.mxu0 %v1806
  %2281 = vmatprep.subr.bf16.mxu0 0
  %2282 = vmatpush1.bf16.msra.mxu0 %v1805
  %2283 = vmatprep.subr.bf16.mxu0 0
  %2284 = vmatpush1.bf16.msra.mxu0 %v1804
  %2285 = vmatprep.subr.bf16.mxu0 0
  %2286 = vmatpush1.bf16.msra.mxu0 %v1803
  %2287 = vmatprep.subr.bf16.mxu0 0
  %2288 = vmatpush1.bf16.msra.mxu0 %v1802
  %2289 = vmatprep.subr.bf16.mxu0 0
  %2290 = vmatpush2.bf16.msra.mxu0 %v1817
  %2291 = vmatprep.subr.bf16.mxu0 0
  %2292 = vmatpush2.bf16.msra.mxu0 %v1816
  %2293 = vmatprep.subr.bf16.mxu0 0
  %2294 = vmatpush2.bf16.msra.mxu0 %v1815
  %2295 = vmatprep.subr.bf16.mxu0 0
  %2296 = vmatpush2.bf16.msra.mxu0 %v1814
  %2297 = vmatprep.subr.bf16.mxu0 0
  %2298 = vmatpush2.bf16.msra.mxu0 %v1813
  %2299 = vmatprep.subr.bf16.mxu0 0
  %2300 = vmatpush2.bf16.msra.mxu0 %v1812
  %2301 = vmatprep.subr.bf16.mxu0 0
  %2302 = vmatpush2.bf16.msra.mxu0 %v1811
  %2303 = vmatprep.subr.bf16.mxu0 0
  %2304 = vmatpush2.bf16.msra.mxu0 %v1810
  %2305 = vmatprep.mubr.bf16.mxu0 %v726
  %2306 = vmatmul.mubr.bf16.gmra.mxu0 %v725
  %v2307 = vpop.f32.mrf.mxu0
  %v2308 = vadd.f32 %v2243, %v2307
  %v2309 = vpop.f32.mrf.mxu0
  %v2310 = vpop.f32.mrf.mxu0
  %v2311 = vadd.f32 %v2246, %v2310
  %v2312 = vpop.f32.mrf.mxu0
  %2313 = vmatprep.mubr.bf16.mxu0 %v742
  %2314 = vmatmul.mubr.bf16.gmra.mxu0 %v741
  %v2315 = vpop.f32.mrf.mxu0
  %v2316 = vadd.f32 %v2251, %v2315
  %v2317 = vpop.f32.mrf.mxu0
  %v2318 = vpop.f32.mrf.mxu0
  %v2319 = vadd.f32 %v2254, %v2318
  %v2320 = vpop.f32.mrf.mxu0
  %2321 = vmatprep.mubr.bf16.mxu0 %v758
  %2322 = vmatmul.mubr.bf16.gmra.mxu0 %v757
  %v2323 = vpop.f32.mrf.mxu0
  %v2324 = vadd.f32 %v2259, %v2323
  %v2325 = vpop.f32.mrf.mxu0
  %v2326 = vpop.f32.mrf.mxu0
  %v2327 = vadd.f32 %v2262, %v2326
  %v2328 = vpop.f32.mrf.mxu0
  %2329 = vmatprep.mubr.bf16.mxu0 %v774
  %2330 = vmatmul.mubr.bf16.gmra.mxu0 %v773
  %v2331 = vpop.f32.mrf.mxu0
  %v2332 = vadd.f32 %v2267, %v2331
  %v2333 = vpop.f32.mrf.mxu0
  %v2334 = vpop.f32.mrf.mxu0
  %v2335 = vadd.f32 %v2270, %v2334
  %v2336 = vpop.f32.mrf.mxu0
  %2337 = vdwg.mxu0
  %v2338 = vmax.f32 %v2308, 0.0
  %v2339 = vmax.f32 %v2311, 0.0
  %v2340 = vmax.f32 %v2316, 0.0
  %v2341 = vmax.f32 %v2319, 0.0
  %v2342 = vmax.f32 %v2324, 0.0
  %v2343 = vmax.f32 %v2327, 0.0
  %v2344 = vmax.f32 %v2332, 0.0
  %v2345 = vmax.f32 %v2335, 0.0
  %v2346 = vpack.c.bf16 %v2339, %v2338
  %v2347 = vpack.c.bf16 %v2341, %v2340
  %v2348 = vpack.c.bf16 %v2343, %v2342
  %v2349 = vpack.c.bf16 %v2345, %v2344
  %2350 = vmatprep.subr.bf16.mxu0 0
  %2351 = vmatpush1.bf16.msra.mxu0 0
  %2352 = vmatprep.subr.bf16.mxu0 0
  %2353 = vmatpush1.bf16.msra.mxu0 0
  %2354 = vmatprep.subr.bf16.mxu0 0
  %2355 = vmatpush1.bf16.msra.mxu0 0
  %2356 = vmatprep.subr.bf16.mxu0 0
  %2357 = vmatpush1.bf16.msra.mxu0 0
  %2358 = vmatprep.subr.bf16.mxu0 0
  %2359 = vmatpush1.bf16.msra.mxu0 %v2349
  %2360 = vmatprep.subr.bf16.mxu0 0
  %2361 = vmatpush1.bf16.msra.mxu0 %v2348
  %2362 = vmatprep.subr.bf16.mxu0 0
  %2363 = vmatpush1.bf16.msra.mxu0 %v2347
  %2364 = vmatprep.subr.bf16.mxu0 0
  %2365 = vmatpush1.bf16.msra.mxu0 %v2346
  %2366 = vmatprep.subr.bf16.mxu0 0
  %2367 = vmatpush2.bf16.msra.mxu0 0
  %2368 = vmatprep.subr.bf16.mxu0 0
  %2369 = vmatpush2.bf16.msra.mxu0 0
  %2370 = vmatprep.subr.bf16.mxu0 0
  %2371 = vmatpush2.bf16.msra.mxu0 0
  %2372 = vmatprep.subr.bf16.mxu0 0
  %2373 = vmatpush2.bf16.msra.mxu0 0
  %2374 = vmatprep.subr.bf16.mxu0 0
  %2375 = vmatpush2.bf16.msra.mxu0 0
  %2376 = vmatprep.subr.bf16.mxu0 0
  %2377 = vmatpush2.bf16.msra.mxu0 0
  %2378 = vmatprep.subr.bf16.mxu0 0
  %2379 = vmatpush2.bf16.msra.mxu0 0
  %2380 = vmatprep.subr.bf16.mxu0 0
  %2381 = vmatpush2.bf16.msra.mxu0 0
  %2382 = vmatprep.mubr.bf16.mxu0 0
  %2383 = vmatmul.mubr.bf16.gmra.mxu0 %v1378
  %v2384 = vpop.f32.mrf.mxu0
  %v2385 = vadd.f32 %v1374, %v2384
  %v2386 = vpop.f32.mrf.mxu0
  %v2387 = vpop.f32.mrf.mxu0
  %v2388 = vpop.f32.mrf.mxu0
  %2389 = vdwg.mxu0
  %v2390 = vsel %vm1420, %v2385, -inf
  %2391 = vmax.xlane.f32.xlu0 %v2390
  %v2392 = vpop.xlane.xlu0 %2391
  %v2393 = vsub.f32 %v2385, %v2392
  %v2394 = vmul.f32 %v2393, 1.442695
  %v2395 = vpow.pop %v2394
  %v2396 = vsel %vm1420, %v2395, 0.0
  %2397 = vadd.xlane.f32.xlu0 %v2396
  %v2398 = vpop.xlane.xlu0 %2397
  %v2399 = vrcp.pop %v2398
  %v2400 = vmul.f32 %v2395, %v2399
  %s2401 = scalar_lea.vmem %s5, 4
  %2402 = vst.msk [vmem:[%s2401] sm:$0x7] %vm1420, %v2400
  // Predicated region
  $region22: #{tpu_custom_call.1} parent=0 // pred_check
    _
  $region23: #{tpu_custom_call.1} parent=0 // pred_check_branch
    %2404 = sbr.rel (0) target = $region25
  $region24: #{tpu_custom_call.1} parent=0 // pred_region
    _
  $region25: #{tpu_custom_call.1} parent=0 // pred_fallthru
    _
  // Predicated region
  $region26: #{tpu_custom_call.1} parent=0 // pred_check
    _
  $region27: #{tpu_custom_call.1} parent=0 // pred_check_branch
    %2406 = sbr.rel (0) target = $region29
  $region28: #{tpu_custom_call.1} parent=0 // pred_region
    _
  $region29: #{tpu_custom_call.1} parent=0 // pred_fallthru
    _

</llo_original>
